<compile_context>
chip_gen: v7x
topology: tpu7x:2x2x1
jax: 0.10.0
libtpu: 0.0.40
codegen_flags: <defaults>
</compile_context>

<pallas_src>
import jax
import jax.numpy as jnp
from jax.experimental import pallas as pl
from jax.experimental.pallas import tpu as pltpu


# ----------------------------- Pallas kernel --------------------------------
def attention_decoder_kernel(
    ids_ref,      # (Bp, 1)   int32 token ids (padded batch)
    h0_ref,       # (Bp, H)   previous hidden state
    enc_ref,      # (Bp, L, H) encoder outputs, batch-major
    emb_ref,      # (Ve, E)   embedding table
    wih_ref,      # (E, 3H)   GRU input weights  (gate order r, z, n)
    whh_ref,      # (H, 3H)   GRU hidden weights
    bih_ref,      # (1, 3H)
    bhh_ref,      # (1, 3H)
    wa_t_ref,     # (H, H)    attention Linear weight, transposed form (h @ wa_t == Wa h)
    ba_ref,       # (1, H)    attention Linear bias
    wc_ctx_ref,   # (H, H)    attention_combine rows acting on context
    wc_h_ref,     # (H, H)    attention_combine rows acting on hidden
    bc_ref,       # (1, H)
    wo_ref,       # (H, V)    output projection
    bo_ref,       # (1, V)
    out_ref,      # (Bp, OUT_W) fused lane-dense output slab
):
    H = h0_ref.shape[-1]
    Bp, L, _ = enc_ref.shape
    V = wo_ref.shape[-1]
    Ve = emb_ref.shape[0]

    h0 = h0_ref[...]
    enc = enc_ref[...]                                        # (Bp, L, H)

    # ---------------- embedding gather (fused, one-hot @ table on MXU) -------
    ids = ids_ref[...]                                        # (Bp, 1) int32
    onehot = (ids == jax.lax.broadcasted_iota(jnp.int32, (Bp, Ve), 1)).astype(jnp.float32)
    emb = jnp.dot(onehot, emb_ref[...], preferred_element_type=jnp.float32)   # (Bp, E)
    # (dropout is identity in eval mode)

    # ---------------- GRU cell (one step, gate order r, z, n) ----------------
    gi = jnp.dot(emb, wih_ref[...], preferred_element_type=jnp.float32) + bih_ref[...]
    gh = jnp.dot(h0, whh_ref[...], preferred_element_type=jnp.float32) + bhh_ref[...]
    r = jax.nn.sigmoid(gi[:, 0 * H:1 * H] + gh[:, 0 * H:1 * H])
    z = jax.nn.sigmoid(gi[:, 1 * H:2 * H] + gh[:, 1 * H:2 * H])
    n = jnp.tanh(gi[:, 2 * H:3 * H] + r * gh[:, 2 * H:3 * H])
    h = (1.0 - z) * n + z * h0                                 # (Bp, H)

    # ---------------- general score: (enc @ Wa + ba) . h == enc . (Wa^T h) + ba . h
    hp = jnp.dot(h, wa_t_ref[...], preferred_element_type=jnp.float32)        # (Bp, H)
    hb = jnp.sum(h * ba_ref[...], axis=1, keepdims=True)                      # (Bp, 1)
    score = jnp.sum(enc * hp[:, None, :], axis=-1) + hb                       # (Bp, L) lane reduce

    # ---------------- softmax over encoder positions --------------------------
    m = jnp.max(score, axis=1, keepdims=True)
    e = jnp.exp(score - m)
    denom = jnp.sum(e, axis=1, keepdims=True)
    inv = pl.reciprocal(denom, approx=True)          # EUP slot
    inv = inv * (2.0 - denom * inv)                  # one Newton step -> f32 accuracy
    attn = e * inv                                   # (Bp, L)

    # ---------------- context = bmm(attn, enc)  (batched MXU matmul) ---------
    ctx = jnp.einsum('bql,blh->bqh', attn[:, None, :], enc,
                     preferred_element_type=jnp.float32)[:, 0, :]             # (Bp, H)

    # ---------------- attention_combine (concat-free) + tanh -----------------
    comb = (jnp.dot(ctx, wc_ctx_ref[...], preferred_element_type=jnp.float32)
            + jnp.dot(h, wc_h_ref[...], preferred_element_type=jnp.float32)
            + bc_ref[...])
    out_ht = jnp.tanh(comb)                                                    # (Bp, H)

    # ---------------- output projection + log_softmax ------------------------
    logits = jnp.dot(out_ht, wo_ref[...], preferred_element_type=jnp.float32) + bo_ref[...]
    lm = jnp.max(logits, axis=1, keepdims=True)
    shifted = logits - lm
    logp = shifted - jnp.log(jnp.sum(jnp.exp(shifted), axis=1, keepdims=True))  # (Bp, V)

    # ---------------- single lane-dense fused output slab --------------------
    out_ref[...] = jnp.zeros_like(out_ref)
    out_ref[:, 0:V] = logp
    out_ref[:, V:V + H] = h
    out_ref[:, V + H:V + H + L] = attn
    out_ref[:, V + H + L:V + 2 * H + L] = out_ht


# ----------------------------- wrapper ---------------------------------------
def attention_decoder_forward(inputs, hidden, encoder_outputs, params):
    """Mirrors AttentionDecoder.forward (eval mode, single decoder step)."""
    B = inputs.shape[0]
    H = hidden.shape[-1]
    L = encoder_outputs.shape[0]
    V = params["wo"].shape[1]

    Bp = ((B + 7) // 8) * 8                       # pad batch to full sublanes
    OUT_W = max(128, ((V + 2 * H + L + 127) // 128) * 128)   # lane-dense output slab

    # Layout plumbing (wrapper-side; no compute hoisted):
    ids = jnp.pad(inputs.reshape(B, 1).astype(jnp.int32), ((0, Bp - B), (0, 0)))
    h0 = jnp.pad(hidden[0], ((0, Bp - B), (0, 0)))
    enc = jnp.pad(jnp.transpose(encoder_outputs, (1, 0, 2)),        # (B, L, H)
                  ((0, Bp - B), (0, 0), (0, 0)))
    wa_t = params["wa"].T                 # so that h @ wa_t == Wa . h
    wc_ctx = params["wc"][:H]             # combine rows acting on context
    wc_h = params["wc"][H:]               # combine rows acting on hidden

    vmem = pl.BlockSpec(memory_space=pltpu.MemorySpace.VMEM)
    n_in = 15

    out = pl.pallas_call(
        attention_decoder_kernel,
        out_shape=jax.ShapeDtypeStruct((Bp, OUT_W), jnp.float32),
        in_specs=[vmem] * n_in,
        out_specs=vmem,
    )(
        ids, h0, enc, params["emb_table"],
        params["wih"], params["whh"], params["bih"], params["bhh"],
        wa_t, params["ba"],
        wc_ctx, wc_h, params["bc"],
        params["wo"], params["bo"],
    )

    logp = out[:B, 0:V]
    h_new = out[:B, V:V + H]
    attn = out[:B, V + H:V + H + L]
    out_ht = out[:B, V + H + L:V + 2 * H + L]
    return logp, h_new[None, :, :], attn, out_ht


# ----------------------------- pure-JAX reference ----------------------------
def reference_forward(inputs, hidden, encoder_outputs, params):
    H = hidden.shape[-1]
    emb = jnp.take(params["emb_table"], inputs.reshape(-1), axis=0)
    h0 = hidden[0]
    gi = emb @ params["wih"] + params["bih"]
    gh = h0 @ params["whh"] + params["bhh"]
    r = jax.nn.sigmoid(gi[:, :H] + gh[:, :H])
    z = jax.nn.sigmoid(gi[:, H:2 * H] + gh[:, H:2 * H])
    n = jnp.tanh(gi[:, 2 * H:] + r * gh[:, 2 * H:])
    h = (1.0 - z) * n + z * h0
    proj = jnp.einsum("lbh,hk->lbk", encoder_outputs, params["wa"]) + params["ba"]
    score = jnp.einsum("lbh,bh->lb", proj, h)
    attn = jax.nn.softmax(score.T, axis=1)
    context = jnp.einsum("bl,lbh->bh", attn, encoder_outputs)
    cat = jnp.concatenate([context, h], axis=1)
    out_ht = jnp.tanh(cat @ params["wc"] + params["bc"])
    logits = out_ht @ params["wo"] + params["bo"]
    logp = jax.nn.log_softmax(logits, axis=1)
    return logp, h[None], attn, out_ht


# ----------------------------- main -------------------------------------------
if __name__ == "__main__":
    # Small shapes consistent with the module's __init__ / forward.
    V = 32    # out_vocab_size
    E = 16    # embed_size
    H = 32    # hidden_size
    B = 2     # batch_size
    L = 8     # max_length / encoder sequence length

    key = jax.random.PRNGKey(0)
    ks = jax.random.split(key, 16)
    s = 0.1

    params = {
        "emb_table": jax.random.normal(ks[0], (V, E), jnp.float32) * s,
        # GRU weights, gate order (r, z, n), stored transposed for x @ W.
        "wih": jax.random.normal(ks[1], (E, 3 * H), jnp.float32) * s,
        "whh": jax.random.normal(ks[2], (H, 3 * H), jnp.float32) * s,
        "bih": jax.random.normal(ks[3], (1, 3 * H), jnp.float32) * s,
        "bhh": jax.random.normal(ks[4], (1, 3 * H), jnp.float32) * s,
        # attention Linear(H, H)
        "wa": jax.random.normal(ks[5], (H, H), jnp.float32) * s,
        "ba": jax.random.normal(ks[6], (1, H), jnp.float32) * s,
        # attention_combine Linear(2H, H)
        "wc": jax.random.normal(ks[7], (2 * H, H), jnp.float32) * s,
        "bc": jax.random.normal(ks[8], (1, H), jnp.float32) * s,
        # out Linear(H, V)
        "wo": jax.random.normal(ks[9], (H, V), jnp.float32) * s,
        "bo": jax.random.normal(ks[10], (1, V), jnp.float32) * s,
    }

    inputs = jax.random.randint(ks[11], (B, 1), 0, V, dtype=jnp.int32)
    hidden = jax.random.normal(ks[12], (1, B, H), jnp.float32) * s
    encoder_outputs = jax.random.normal(ks[13], (L, B, H), jnp.float32) * s

    outs = attention_decoder_forward(inputs, hidden, encoder_outputs, params)
    outs = jax.block_until_ready(outs)

    refs = reference_forward(inputs, hidden, encoder_outputs, params)
    for o, r in zip(outs, refs):
        assert o.shape == r.shape and o.dtype == r.dtype
        assert jnp.allclose(o, r, atol=1e-4, rtol=1e-4), "mismatch vs reference"

    print("KERNEL_OK")
</pallas_src>

<mosaic_0001>
module attributes {stable_mosaic.version = 11 : i64} {
  func.func @attention_decoder_kernel(%arg0: memref<8x1xi32, #tpu.memory_space<vmem>>, %arg1: memref<8x32xf32, #tpu.memory_space<vmem>>, %arg2: memref<8x8x32xf32, #tpu.memory_space<vmem>>, %arg3: memref<32x16xf32, #tpu.memory_space<vmem>>, %arg4: memref<16x96xf32, #tpu.memory_space<vmem>>, %arg5: memref<32x96xf32, #tpu.memory_space<vmem>>, %arg6: memref<1x96xf32, #tpu.memory_space<vmem>>, %arg7: memref<1x96xf32, #tpu.memory_space<vmem>>, %arg8: memref<32x32xf32, #tpu.memory_space<vmem>>, %arg9: memref<1x32xf32, #tpu.memory_space<vmem>>, %arg10: memref<32x32xf32, #tpu.memory_space<vmem>>, %arg11: memref<32x32xf32, #tpu.memory_space<vmem>>, %arg12: memref<1x32xf32, #tpu.memory_space<vmem>>, %arg13: memref<32x32xf32, #tpu.memory_space<vmem>>, %arg14: memref<1x32xf32, #tpu.memory_space<vmem>>, %arg15: memref<8x128xf32, #tpu.memory_space<vmem>>) attributes {dimension_semantics = [], scalar_prefetch = 0 : i64, scratch_operands = 0 : i64, tpu.core_type = #tpu.core_type<tc>} {
    %c0 = arith.constant 0 : index
    %c0_0 = arith.constant 0 : index
    %0 = vector.load %arg1[%c0, %c0_0] : memref<8x32xf32, #tpu.memory_space<vmem>>, vector<8x32xf32>
    %c0_1 = arith.constant 0 : index
    %c0_2 = arith.constant 0 : index
    %c0_3 = arith.constant 0 : index
    %1 = vector.load %arg2[%c0_1, %c0_2, %c0_3] : memref<8x8x32xf32, #tpu.memory_space<vmem>>, vector<8x8x32xf32>
    %c0_4 = arith.constant 0 : index
    %c0_5 = arith.constant 0 : index
    %2 = vector.load %arg0[%c0_4, %c0_5] : memref<8x1xi32, #tpu.memory_space<vmem>>, vector<8x1xi32>
    %3 = tpu.iota {dimensions = array<i32: 1>} : vector<8x32xi32>
    %4 = vector.broadcast %2 : vector<8x1xi32> to vector<8x32xi32>
    %5 = arith.cmpi eq, %4, %3 : vector<8x32xi32>
    %6 = arith.extui %5 : vector<8x32xi1> to vector<8x32xi32>
    %7 = arith.sitofp %6 : vector<8x32xi32> to vector<8x32xf32>
    %c0_6 = arith.constant 0 : index
    %c0_7 = arith.constant 0 : index
    %8 = vector.load %arg3[%c0_6, %c0_7] : memref<32x16xf32, #tpu.memory_space<vmem>>, vector<32x16xf32>
    %cst = arith.constant dense<0.000000e+00> : vector<8x16xf32>
    %9 = tpu.matmul %7, %8, %cst {dimension_numbers = #tpu.dot_dimension_numbers<[1], [0], [0], [1], [0, 0, 1, 1], [], []>} : vector<8x32xf32>, vector<32x16xf32>, vector<8x16xf32> -> vector<8x16xf32>
    %c0_8 = arith.constant 0 : index
    %c0_9 = arith.constant 0 : index
    %10 = vector.load %arg4[%c0_8, %c0_9] : memref<16x96xf32, #tpu.memory_space<vmem>>, vector<16x96xf32>
    %cst_10 = arith.constant dense<0.000000e+00> : vector<8x96xf32>
    %11 = tpu.matmul %9, %10, %cst_10 {dimension_numbers = #tpu.dot_dimension_numbers<[1], [0], [0], [1], [0, 0, 1, 1], [], []>} : vector<8x16xf32>, vector<16x96xf32>, vector<8x96xf32> -> vector<8x96xf32>
    %c0_11 = arith.constant 0 : index
    %c0_12 = arith.constant 0 : index
    %12 = vector.load %arg6[%c0_11, %c0_12] : memref<1x96xf32, #tpu.memory_space<vmem>>, vector<1x96xf32>
    %13 = vector.broadcast %12 : vector<1x96xf32> to vector<8x96xf32>
    %14 = arith.addf %11, %13 : vector<8x96xf32>
    %c0_13 = arith.constant 0 : index
    %c0_14 = arith.constant 0 : index
    %15 = vector.load %arg5[%c0_13, %c0_14] : memref<32x96xf32, #tpu.memory_space<vmem>>, vector<32x96xf32>
    %cst_15 = arith.constant dense<0.000000e+00> : vector<8x96xf32>
    %16 = tpu.matmul %0, %15, %cst_15 {dimension_numbers = #tpu.dot_dimension_numbers<[1], [0], [0], [1], [0, 0, 1, 1], [], []>} : vector<8x32xf32>, vector<32x96xf32>, vector<8x96xf32> -> vector<8x96xf32>
    %c0_16 = arith.constant 0 : index
    %c0_17 = arith.constant 0 : index
    %17 = vector.load %arg7[%c0_16, %c0_17] : memref<1x96xf32, #tpu.memory_space<vmem>>, vector<1x96xf32>
    %18 = vector.broadcast %17 : vector<1x96xf32> to vector<8x96xf32>
    %19 = arith.addf %16, %18 : vector<8x96xf32>
    %20 = vector.extract_strided_slice %14 {offsets = [0, 0], sizes = [8, 32], strides = [1, 1]} : vector<8x96xf32> to vector<8x32xf32>
    %21 = vector.extract_strided_slice %19 {offsets = [0, 0], sizes = [8, 32], strides = [1, 1]} : vector<8x96xf32> to vector<8x32xf32>
    %22 = arith.addf %20, %21 : vector<8x32xf32>
    %23 = arith.negf %22 : vector<8x32xf32>
    %24 = math.exp %23 : vector<8x32xf32>
    %cst_18 = arith.constant 1.000000e+00 : f32
    %25 = vector.broadcast %cst_18 : f32 to vector<8x32xf32>
    %26 = arith.addf %25, %24 : vector<8x32xf32>
    %27 = arith.divf %25, %26 : vector<8x32xf32>
    %28 = vector.extract_strided_slice %14 {offsets = [0, 32], sizes = [8, 32], strides = [1, 1]} : vector<8x96xf32> to vector<8x32xf32>
    %29 = vector.extract_strided_slice %19 {offsets = [0, 32], sizes = [8, 32], strides = [1, 1]} : vector<8x96xf32> to vector<8x32xf32>
    %30 = arith.addf %28, %29 : vector<8x32xf32>
    %31 = arith.negf %30 : vector<8x32xf32>
    %32 = math.exp %31 : vector<8x32xf32>
    %cst_19 = arith.constant 1.000000e+00 : f32
    %33 = vector.broadcast %cst_19 : f32 to vector<8x32xf32>
    %34 = arith.addf %33, %32 : vector<8x32xf32>
    %35 = arith.divf %33, %34 : vector<8x32xf32>
    %36 = vector.extract_strided_slice %14 {offsets = [0, 64], sizes = [8, 32], strides = [1, 1]} : vector<8x96xf32> to vector<8x32xf32>
    %37 = vector.extract_strided_slice %19 {offsets = [0, 64], sizes = [8, 32], strides = [1, 1]} : vector<8x96xf32> to vector<8x32xf32>
    %38 = arith.mulf %27, %37 : vector<8x32xf32>
    %39 = arith.addf %36, %38 : vector<8x32xf32>
    %40 = math.tanh %39 : vector<8x32xf32>
    %cst_20 = arith.constant 1.000000e+00 : f32
    %41 = vector.broadcast %cst_20 : f32 to vector<8x32xf32>
    %42 = arith.subf %41, %35 : vector<8x32xf32>
    %43 = arith.mulf %42, %40 : vector<8x32xf32>
    %44 = arith.mulf %35, %0 : vector<8x32xf32>
    %45 = arith.addf %43, %44 : vector<8x32xf32>
    %c0_21 = arith.constant 0 : index
    %c0_22 = arith.constant 0 : index
    %46 = vector.load %arg8[%c0_21, %c0_22] : memref<32x32xf32, #tpu.memory_space<vmem>>, vector<32x32xf32>
    %cst_23 = arith.constant dense<0.000000e+00> : vector<8x32xf32>
    %47 = tpu.matmul %45, %46, %cst_23 {dimension_numbers = #tpu.dot_dimension_numbers<[1], [0], [0], [1], [0, 0, 1, 1], [], []>} : vector<8x32xf32>, vector<32x32xf32>, vector<8x32xf32> -> vector<8x32xf32>
    %c0_24 = arith.constant 0 : index
    %c0_25 = arith.constant 0 : index
    %48 = vector.load %arg9[%c0_24, %c0_25] : memref<1x32xf32, #tpu.memory_space<vmem>>, vector<1x32xf32>
    %49 = vector.broadcast %48 : vector<1x32xf32> to vector<8x32xf32>
    %50 = arith.mulf %45, %49 : vector<8x32xf32>
    %cst_26 = arith.constant dense<0.000000e+00> : vector<8xf32>
    %51 = vector.multi_reduction <add>, %50, %cst_26 [1] : vector<8x32xf32> to vector<8xf32>
    %52 = vector.shape_cast %51 : vector<8xf32> to vector<8x1xf32>
    %53 = vector.shape_cast %47 : vector<8x32xf32> to vector<8x1x32xf32>
    %54 = vector.broadcast %53 : vector<8x1x32xf32> to vector<8x8x32xf32>
    %55 = arith.mulf %1, %54 : vector<8x8x32xf32>
    %cst_27 = arith.constant dense<0.000000e+00> : vector<8x8xf32>
    %56 = vector.multi_reduction <add>, %55, %cst_27 [2] : vector<8x8x32xf32> to vector<8x8xf32>
    %57 = vector.broadcast %52 : vector<8x1xf32> to vector<8x8xf32>
    %58 = arith.addf %56, %57 : vector<8x8xf32>
    %cst_28 = arith.constant dense<0xFF800000> : vector<8xf32>
    %59 = vector.multi_reduction <maximumf>, %58, %cst_28 [1] : vector<8x8xf32> to vector<8xf32>
    %60 = vector.shape_cast %59 : vector<8xf32> to vector<8x1xf32>
    %61 = vector.broadcast %60 : vector<8x1xf32> to vector<8x8xf32>
    %62 = arith.subf %58, %61 : vector<8x8xf32>
    %63 = math.exp %62 : vector<8x8xf32>
    %cst_29 = arith.constant dense<0.000000e+00> : vector<8xf32>
    %64 = vector.multi_reduction <add>, %63, %cst_29 [1] : vector<8x8xf32> to vector<8xf32>
    %65 = vector.shape_cast %64 : vector<8xf32> to vector<8x1xf32>
    %66 = tpu.reciprocal %65 {approx = true} : vector<8x1xf32> -> vector<8x1xf32>
    %67 = arith.mulf %65, %66 : vector<8x1xf32>
    %cst_30 = arith.constant 2.000000e+00 : f32
    %68 = vector.broadcast %cst_30 : f32 to vector<8x1xf32>
    %69 = arith.subf %68, %67 : vector<8x1xf32>
    %70 = arith.mulf %66, %69 : vector<8x1xf32>
    %71 = vector.broadcast %70 : vector<8x1xf32> to vector<8x8xf32>
    %72 = arith.mulf %63, %71 : vector<8x8xf32>
    %73 = vector.shape_cast %72 : vector<8x8xf32> to vector<8x1x8xf32>
    "tpu.trace_start"() <{level = 10 : i32, message = "bql,blh->bqh"}> : () -> ()
    %cst_31 = arith.constant dense<0.000000e+00> : vector<8x1x32xf32>
    %74 = tpu.matmul %73, %1, %cst_31 {dimension_numbers = #tpu.dot_dimension_numbers<[2], [1], [1], [2], [0, 0, 0, 1, 1, 2], [0], [0]>} : vector<8x1x8xf32>, vector<8x8x32xf32>, vector<8x1x32xf32> -> vector<8x1x32xf32>
    "tpu.trace_stop"() : () -> ()
    %75 = vector.shape_cast %74 : vector<8x1x32xf32> to vector<8x32xf32>
    %c0_32 = arith.constant 0 : index
    %c0_33 = arith.constant 0 : index
    %76 = vector.load %arg10[%c0_32, %c0_33] : memref<32x32xf32, #tpu.memory_space<vmem>>, vector<32x32xf32>
    %cst_34 = arith.constant dense<0.000000e+00> : vector<8x32xf32>
    %77 = tpu.matmul %75, %76, %cst_34 {dimension_numbers = #tpu.dot_dimension_numbers<[1], [0], [0], [1], [0, 0, 1, 1], [], []>} : vector<8x32xf32>, vector<32x32xf32>, vector<8x32xf32> -> vector<8x32xf32>
    %c0_35 = arith.constant 0 : index
    %c0_36 = arith.constant 0 : index
    %78 = vector.load %arg11[%c0_35, %c0_36] : memref<32x32xf32, #tpu.memory_space<vmem>>, vector<32x32xf32>
    %cst_37 = arith.constant dense<0.000000e+00> : vector<8x32xf32>
    %79 = tpu.matmul %45, %78, %cst_37 {dimension_numbers = #tpu.dot_dimension_numbers<[1], [0], [0], [1], [0, 0, 1, 1], [], []>} : vector<8x32xf32>, vector<32x32xf32>, vector<8x32xf32> -> vector<8x32xf32>
    %80 = arith.addf %77, %79 : vector<8x32xf32>
    %c0_38 = arith.constant 0 : index
    %c0_39 = arith.constant 0 : index
    %81 = vector.load %arg12[%c0_38, %c0_39] : memref<1x32xf32, #tpu.memory_space<vmem>>, vector<1x32xf32>
    %82 = vector.broadcast %81 : vector<1x32xf32> to vector<8x32xf32>
    %83 = arith.addf %80, %82 : vector<8x32xf32>
    %84 = math.tanh %83 : vector<8x32xf32>
    %c0_40 = arith.constant 0 : index
    %c0_41 = arith.constant 0 : index
    %85 = vector.load %arg13[%c0_40, %c0_41] : memref<32x32xf32, #tpu.memory_space<vmem>>, vector<32x32xf32>
    %cst_42 = arith.constant dense<0.000000e+00> : vector<8x32xf32>
    %86 = tpu.matmul %84, %85, %cst_42 {dimension_numbers = #tpu.dot_dimension_numbers<[1], [0], [0], [1], [0, 0, 1, 1], [], []>} : vector<8x32xf32>, vector<32x32xf32>, vector<8x32xf32> -> vector<8x32xf32>
    %c0_43 = arith.constant 0 : index
    %c0_44 = arith.constant 0 : index
    %87 = vector.load %arg14[%c0_43, %c0_44] : memref<1x32xf32, #tpu.memory_space<vmem>>, vector<1x32xf32>
    %88 = vector.broadcast %87 : vector<1x32xf32> to vector<8x32xf32>
    %89 = arith.addf %86, %88 : vector<8x32xf32>
    %cst_45 = arith.constant dense<0xFF800000> : vector<8xf32>
    %90 = vector.multi_reduction <maximumf>, %89, %cst_45 [1] : vector<8x32xf32> to vector<8xf32>
    %91 = vector.shape_cast %90 : vector<8xf32> to vector<8x1xf32>
    %92 = vector.broadcast %91 : vector<8x1xf32> to vector<8x32xf32>
    %93 = arith.subf %89, %92 : vector<8x32xf32>
    %94 = math.exp %93 : vector<8x32xf32>
    %cst_46 = arith.constant dense<0.000000e+00> : vector<8xf32>
    %95 = vector.multi_reduction <add>, %94, %cst_46 [1] : vector<8x32xf32> to vector<8xf32>
    %96 = vector.shape_cast %95 : vector<8xf32> to vector<8x1xf32>
    %97 = math.log %96 : vector<8x1xf32>
    %98 = vector.broadcast %97 : vector<8x1xf32> to vector<8x32xf32>
    %99 = arith.subf %93, %98 : vector<8x32xf32>
    %cst_47 = arith.constant 0.000000e+00 : f32
    %100 = vector.broadcast %cst_47 : f32 to vector<8x128xf32>
    %c0_48 = arith.constant 0 : index
    %c0_49 = arith.constant 0 : index
    %101 = vector.load %arg15[%c0_48, %c0_49] : memref<8x128xf32, #tpu.memory_space<vmem>>, vector<8x128xf32>
    tpu.vector_store %arg15[%c0_48, %c0_49], %100 {strides = array<i32>} : memref<8x128xf32, #tpu.memory_space<vmem>>, vector<8x128xf32>,
    %c0_50 = arith.constant 0 : index
    %c0_51 = arith.constant 0 : index
    %102 = vector.load %arg15[%c0_50, %c0_51] : memref<8x128xf32, #tpu.memory_space<vmem>>, vector<8x32xf32>
    tpu.vector_store %arg15[%c0_50, %c0_51], %99 {strides = array<i32>} : memref<8x128xf32, #tpu.memory_space<vmem>>, vector<8x32xf32>,
    %c0_52 = arith.constant 0 : index
    %c32 = arith.constant 32 : index
    %103 = vector.load %arg15[%c0_52, %c32] : memref<8x128xf32, #tpu.memory_space<vmem>>, vector<8x32xf32>
    tpu.vector_store %arg15[%c0_52, %c32], %45 {strides = array<i32>} : memref<8x128xf32, #tpu.memory_space<vmem>>, vector<8x32xf32>,
    %c0_53 = arith.constant 0 : index
    %c64 = arith.constant 64 : index
    %104 = vector.load %arg15[%c0_53, %c64] : memref<8x128xf32, #tpu.memory_space<vmem>>, vector<8x8xf32>
    tpu.vector_store %arg15[%c0_53, %c64], %72 {strides = array<i32>} : memref<8x128xf32, #tpu.memory_space<vmem>>, vector<8x8xf32>,
    %c0_54 = arith.constant 0 : index
    %c72 = arith.constant 72 : index
    %105 = vector.load %arg15[%c0_54, %c72] : memref<8x128xf32, #tpu.memory_space<vmem>>, vector<8x32xf32>
    tpu.vector_store %arg15[%c0_54, %c72], %84 {strides = array<i32>} : memref<8x128xf32, #tpu.memory_space<vmem>>, vector<8x32xf32>,
    return
  }
}

</mosaic_0001>

<llo_original>
// kernel: tpu_custom_call.1
$region0: #{tpu_custom_call.1}
  #allocation0 [shape = 'u32[]', space=smem, size = 0x4, offset = 0x4, fixed_abs, tag = 'smem constant byte address 0x4 - core index']
  #allocation1 [shape = 'u32[144,128]{1,0:T(1,128)}', space=vmem, size = 0x12000, scoped, tag = 'internal scratch']
  %s0 = inlined_call_operand.vmem [shape: s32[8,1], index: 0, kind: input, shape index: {}]
  %s1 = inlined_call_operand.hbm [shape: f32[8,32], index: 1, kind: input, shape index: {}]
  %s2 = inlined_call_operand.vmem [shape: f32[8,8,32], index: 2, kind: input, shape index: {}]
  %s3 = inlined_call_operand.vmem [shape: f32[32,16], index: 3, kind: input, shape index: {}]
  %s4 = inlined_call_operand.hbm [shape: f32[16,96], index: 4, kind: input, shape index: {}]
  %s5 = inlined_call_operand.hbm [shape: f32[32,96], index: 5, kind: input, shape index: {}]
  %s6 = inlined_call_operand.vmem [shape: f32[1,96], index: 6, kind: input, shape index: {}]
  %s7 = inlined_call_operand.vmem [shape: f32[1,96], index: 7, kind: input, shape index: {}]
  %s8 = inlined_call_operand.hbm [shape: f32[32,32], index: 8, kind: input, shape index: {}]
  %s9 = inlined_call_operand.hbm [shape: f32[1,32], index: 9, kind: input, shape index: {}]
  %s10 = inlined_call_operand.hbm [shape: f32[32,32], index: 10, kind: input, shape index: {}]
  %s11 = inlined_call_operand.vmem [shape: f32[32,32], index: 11, kind: input, shape index: {}]
  %s12 = inlined_call_operand.vmem [shape: f32[1,32], index: 12, kind: input, shape index: {}]
  %s13 = inlined_call_operand.hbm [shape: f32[32,32], index: 13, kind: input, shape index: {}]
  %s14 = inlined_call_operand.vmem [shape: f32[1,32], index: 14, kind: input, shape index: {}]
  %s15 = inlined_call_operand.hbm [shape: f32[8,128], index: 15, kind: output, shape index: {}]
  %s16 = sld [smem:[#allocation0]]
  $region98: #{tpu_custom_call.1} parent=0
    _
  %s18 = ssub.s32 1, %s16
  %s19 = scalar_select 0, %s18, %s16
  $region1: #{tpu_custom_call.1} parent=0
    #allocation2 [shape = 'u8[4096]{0}', space=vmem, size = 0x1000, scoped, tag = 'input window, operand 1, single buffered']
    #allocation3 [shape = 's32[1]{0}', space=sflag, size = 0x4, scoped, tag = 'scoped memory for tpu_custom_call.1']
    #allocation4 [shape = 's32[1]{0}', space=sflag, size = 0x4, scoped, tag = 'scoped memory for tpu_custom_call.1']
    #allocation5 [shape = 'u8[8192]{0}', space=vmem, size = 0x2000, scoped, tag = 'input window, operand 4, single buffered']
    #allocation6 [shape = 's32[1]{0}', space=sflag, size = 0x4, scoped, tag = 'scoped memory for tpu_custom_call.1']
    #allocation7 [shape = 'u8[16384]{0}', space=vmem, size = 0x4000, scoped, tag = 'input window, operand 5, single buffered']
    #allocation8 [shape = 'u8[16384]{0}', space=vmem, size = 0x4000, scoped, tag = 'input window, operand 8, single buffered']
    #allocation9 [shape = 's32[1]{0}', space=sflag, size = 0x4, scoped, tag = 'scoped memory for tpu_custom_call.1']
    #allocation10 [shape = 'u8[512]{0}', space=vmem, size = 0x400, scoped, tag = 'input window, operand 9, single buffered']
    #allocation11 [shape = 'u8[16384]{0}', space=vmem, size = 0x4000, scoped, tag = 'input window, operand 10, single buffered']
    #allocation12 [shape = 's32[1]{0}', space=sflag, size = 0x4, scoped, tag = 'scoped memory for tpu_custom_call.1']
    #allocation13 [shape = 'u8[16384]{0}', space=vmem, size = 0x4000, scoped, tag = 'input window, operand 13, single buffered']
    #allocation14 [shape = 'u8[4096]{0}', space=vmem, size = 0x1000, scoped, tag = 'output window, operand 0, single buffered']
    %20 = vsyncpa [#allocation3], 0
    %21 = vsyncpa [#allocation6], 0
    %22 = vsyncpa [#allocation9], 0
    %23 = vsyncpa [#allocation12], 0
    %24 = vsyncpa [#allocation4], 0
    // Predicated region
    $region2: #{tpu_custom_call.1} parent=1 // pred_check
      _
    $region3: #{tpu_custom_call.1} parent=1 // pred_check_branch
      %26 = sbr.rel (0) target = $region5
    $region4: #{tpu_custom_call.1} parent=1 // pred_region
      _
    $region5: #{tpu_custom_call.1} parent=1 // pred_fallthru
      _
    // Predicated region
    $region6: #{tpu_custom_call.1} parent=1 // pred_check
      _
    $region7: #{tpu_custom_call.1} parent=1 // pred_check_branch
      %28 = sbr.rel (0) target = $region9
    $region8: #{tpu_custom_call.1} parent=1 // pred_region
      %s30 = ssub.s32 128, 128
      %31 = vsyncadd [#allocation3], %s30
      %s33 = sshll.u32 [#allocation2], 4
      %s34 = int_to_ptr.vmem [resolvable:$true] %s33
      %36 = dma.hbm_to_vmem [thread:$0]  %s1, 128, %s34, [#allocation3]
    $region9: #{tpu_custom_call.1} parent=1 // pred_fallthru
      _
    // Predicated region
    $region10: #{tpu_custom_call.1} parent=1 // pred_check
      _
    $region11: #{tpu_custom_call.1} parent=1 // pred_check_branch
      %38 = sbr.rel (0) target = $region13
    $region12: #{tpu_custom_call.1} parent=1 // pred_region
      _
    $region13: #{tpu_custom_call.1} parent=1 // pred_fallthru
      _
    // Predicated region
    $region14: #{tpu_custom_call.1} parent=1 // pred_check
      _
    $region15: #{tpu_custom_call.1} parent=1 // pred_check_branch
      %40 = sbr.rel (0) target = $region17
    $region16: #{tpu_custom_call.1} parent=1 // pred_region
      _
    $region17: #{tpu_custom_call.1} parent=1 // pred_fallthru
      _
    // Predicated region
    $region18: #{tpu_custom_call.1} parent=1 // pred_check
      _
    $region19: #{tpu_custom_call.1} parent=1 // pred_check_branch
      %42 = sbr.rel (0) target = $region21
    $region20: #{tpu_custom_call.1} parent=1 // pred_region
      %s44 = ssub.s32 256, 256
      %45 = vsyncadd [#allocation6], %s44
      %s46 = sshll.u32 [#allocation5], 4
      %s47 = int_to_ptr.vmem [resolvable:$true] %s46
      %52 = dma.hbm_to_vmem [thread:$0]  %s4, 256, %s47, [#allocation6], 128, 128, 8
    $region21: #{tpu_custom_call.1} parent=1 // pred_fallthru
      _
    // Predicated region
    $region22: #{tpu_custom_call.1} parent=1 // pred_check
      _
    $region23: #{tpu_custom_call.1} parent=1 // pred_check_branch
      %54 = sbr.rel (0) target = $region25
    $region24: #{tpu_custom_call.1} parent=1 // pred_region
      %s56 = ssub.s32 512, 512
      %57 = vsyncadd [#allocation6], %s56
      %s58 = sshll.u32 [#allocation7], 4
      %s59 = int_to_ptr.vmem [resolvable:$true] %s58
      %64 = dma.hbm_to_vmem [thread:$0]  %s5, 512, %s59, [#allocation6], 128, 128, 8
    $region25: #{tpu_custom_call.1} parent=1 // pred_fallthru
      _
    // Predicated region
    $region26: #{tpu_custom_call.1} parent=1 // pred_check
      _
    $region27: #{tpu_custom_call.1} parent=1 // pred_check_branch
      %66 = sbr.rel (0) target = $region29
    $region28: #{tpu_custom_call.1} parent=1 // pred_region
      _
    $region29: #{tpu_custom_call.1} parent=1 // pred_fallthru
      _
    // Predicated region
    $region30: #{tpu_custom_call.1} parent=1 // pred_check
      _
    $region31: #{tpu_custom_call.1} parent=1 // pred_check_branch
      %68 = sbr.rel (0) target = $region33
    $region32: #{tpu_custom_call.1} parent=1 // pred_region
      _
    $region33: #{tpu_custom_call.1} parent=1 // pred_fallthru
      _
    // Predicated region
    $region34: #{tpu_custom_call.1} parent=1 // pred_check
      _
    $region35: #{tpu_custom_call.1} parent=1 // pred_check_branch
      %70 = sbr.rel (0) target = $region37
    $region36: #{tpu_custom_call.1} parent=1 // pred_region
      %s72 = ssub.s32 512, 512
      %73 = vsyncadd [#allocation9], %s72
      %s74 = sshll.u32 [#allocation8], 4
      %s75 = int_to_ptr.vmem [resolvable:$true] %s74
      %80 = dma.hbm_to_vmem [thread:$0]  %s8, 512, %s75, [#allocation9], 128, 128, 8
    $region37: #{tpu_custom_call.1} parent=1 // pred_fallthru
      _
    // Predicated region
    $region38: #{tpu_custom_call.1} parent=1 // pred_check
      _
    $region39: #{tpu_custom_call.1} parent=1 // pred_check_branch
      %82 = sbr.rel (0) target = $region41
    $region40: #{tpu_custom_call.1} parent=1 // pred_region
      %s84 = ssub.s32 16, 16
      %85 = vsyncadd [#allocation9], %s84
      %s87 = sshll.u32 [#allocation10], 4
      %s88 = int_to_ptr.vmem [resolvable:$true] %s87
      %90 = dma.hbm_to_vmem [thread:$0]  %s9, 16, %s88, [#allocation9]
    $region41: #{tpu_custom_call.1} parent=1 // pred_fallthru
      _
    // Predicated region
    $region42: #{tpu_custom_call.1} parent=1 // pred_check
      _
    $region43: #{tpu_custom_call.1} parent=1 // pred_check_branch
      %92 = sbr.rel (0) target = $region45
    $region44: #{tpu_custom_call.1} parent=1 // pred_region
      %s94 = ssub.s32 512, 512
      %95 = vsyncadd [#allocation12], %s94
      %s96 = sshll.u32 [#allocation11], 4
      %s97 = int_to_ptr.vmem [resolvable:$true] %s96
      %102 = dma.hbm_to_vmem [thread:$0]  %s10, 512, %s97, [#allocation12], 128, 128, 8
    $region45: #{tpu_custom_call.1} parent=1 // pred_fallthru
      _
    // Predicated region
    $region46: #{tpu_custom_call.1} parent=1 // pred_check
      _
    $region47: #{tpu_custom_call.1} parent=1 // pred_check_branch
      %104 = sbr.rel (0) target = $region49
    $region48: #{tpu_custom_call.1} parent=1 // pred_region
      _
    $region49: #{tpu_custom_call.1} parent=1 // pred_fallthru
      _
    // Predicated region
    $region50: #{tpu_custom_call.1} parent=1 // pred_check
      _
    $region51: #{tpu_custom_call.1} parent=1 // pred_check_branch
      %106 = sbr.rel (0) target = $region53
    $region52: #{tpu_custom_call.1} parent=1 // pred_region
      _
    $region53: #{tpu_custom_call.1} parent=1 // pred_fallthru
      _
    // Predicated region
    $region54: #{tpu_custom_call.1} parent=1 // pred_check
      _
    $region55: #{tpu_custom_call.1} parent=1 // pred_check_branch
      %108 = sbr.rel (0) target = $region57
    $region56: #{tpu_custom_call.1} parent=1 // pred_region
      %s110 = ssub.s32 512, 512
      %111 = vsyncadd [#allocation12], %s110
      %s112 = sshll.u32 [#allocation13], 4
      %s113 = int_to_ptr.vmem [resolvable:$true] %s112
      %118 = dma.hbm_to_vmem [thread:$0]  %s13, 512, %s113, [#allocation12], 128, 128, 8
    $region57: #{tpu_custom_call.1} parent=1 // pred_fallthru
      _
    // Predicated region
    $region58: #{tpu_custom_call.1} parent=1 // pred_check
      _
    $region59: #{tpu_custom_call.1} parent=1 // pred_check_branch
      %120 = sbr.rel (0) target = $region61
    $region60: #{tpu_custom_call.1} parent=1 // pred_region
      _
    $region61: #{tpu_custom_call.1} parent=1 // pred_fallthru
      _
    // Predicated region
    $region62: #{tpu_custom_call.1} parent=1 // pred_check
      _
    $region63: #{tpu_custom_call.1} parent=1 // pred_check_branch
      %122 = sbr.rel (0) target = $region65
    $region64: #{tpu_custom_call.1} parent=1 // pred_region
      %123 = dma.done [#allocation3], 128
    $region65: #{tpu_custom_call.1} parent=1 // pred_fallthru
      _
    // Predicated region
    $region66: #{tpu_custom_call.1} parent=1 // pred_check
      _
    $region67: #{tpu_custom_call.1} parent=1 // pred_check_branch
      %125 = sbr.rel (0) target = $region69
    $region68: #{tpu_custom_call.1} parent=1 // pred_region
      %126 = dma.done [#allocation6], 256
    $region69: #{tpu_custom_call.1} parent=1 // pred_fallthru
      _
    // Predicated region
    $region70: #{tpu_custom_call.1} parent=1 // pred_check
      _
    $region71: #{tpu_custom_call.1} parent=1 // pred_check_branch
      %128 = sbr.rel (0) target = $region73
    $region72: #{tpu_custom_call.1} parent=1 // pred_region
      %129 = dma.done [#allocation6], 512
    $region73: #{tpu_custom_call.1} parent=1 // pred_fallthru
      _
    // Predicated region
    $region74: #{tpu_custom_call.1} parent=1 // pred_check
      _
    $region75: #{tpu_custom_call.1} parent=1 // pred_check_branch
      %131 = sbr.rel (0) target = $region77
    $region76: #{tpu_custom_call.1} parent=1 // pred_region
      %132 = dma.done [#allocation9], 512
    $region77: #{tpu_custom_call.1} parent=1 // pred_fallthru
      _
    // Predicated region
    $region78: #{tpu_custom_call.1} parent=1 // pred_check
      _
    $region79: #{tpu_custom_call.1} parent=1 // pred_check_branch
      %134 = sbr.rel (0) target = $region81
    $region80: #{tpu_custom_call.1} parent=1 // pred_region
      %135 = dma.done [#allocation9], 16
    $region81: #{tpu_custom_call.1} parent=1 // pred_fallthru
      _
    // Predicated region
    $region82: #{tpu_custom_call.1} parent=1 // pred_check
      _
    $region83: #{tpu_custom_call.1} parent=1 // pred_check_branch
      %137 = sbr.rel (0) target = $region85
    $region84: #{tpu_custom_call.1} parent=1 // pred_region
      %138 = dma.done [#allocation12], 512
    $region85: #{tpu_custom_call.1} parent=1 // pred_fallthru
      _
    // Predicated region
    $region86: #{tpu_custom_call.1} parent=1 // pred_check
      _
    $region87: #{tpu_custom_call.1} parent=1 // pred_check_branch
      %140 = sbr.rel (0) target = $region89
    $region88: #{tpu_custom_call.1} parent=1 // pred_region
      %141 = dma.done [#allocation12], 512
    $region89: #{tpu_custom_call.1} parent=1 // pred_fallthru
      _
    %v142 = vld [vmem:[#allocation2] sm:$0xff]
    %v143 = vld [vmem:[%s2] sm:$0xff]
    %v144 = vld [vmem:[%s2 + $0x8] sm:$0xff]
    %v145 = vld [vmem:[%s2 + $0x10] sm:$0xff]
    %v146 = vld [vmem:[%s2 + $0x18] sm:$0xff]
    %v147 = vld [vmem:[%s2 + $0x20] sm:$0xff]
    %v148 = vld [vmem:[%s2 + $0x28] sm:$0xff]
    %v149 = vld [vmem:[%s2 + $0x30] sm:$0xff]
    %v150 = vld [vmem:[%s2 + $0x38] sm:$0xff]
    %v151 = vld [vmem:[%s0] sm:$0xff]
    %v152 = vlaneseq
    %v153 = vand.u32 %v152, 127
    %154 = vset.pattern.permute.xlu0 0
    %155 = vperm.xlu0 %154, %v151
    %v156 = vpop.permute.xlu0 %155
    %vm157 = vcmp.eq.s32.totalorder %v156, %v153
    %v158 = vsel %vm157, 1, 0
    %v159 = vcvt.s32.f32 %v158
    %v160 = vld [vmem:[%s3] sm:$0xff]
    %v161 = vld [vmem:[%s3 + $0x8] sm:$0xff]
    %v162 = vld [vmem:[%s3 + $0x10] sm:$0xff]
    %v163 = vld [vmem:[%s3 + $0x18] sm:$0xff]
    %vm164 = vcmask 261120
    %v166 = vsel %vm164, %v159, 0
    %168 = vmatprep.subr.mxu0 0.0
    %169 = vmatpush1.msra.mxu0 %v160
    %170 = vmatprep.subr.mxu0 0.0
    %171 = vmatpush1.msra.mxu0 %v161
    %172 = vmatprep.subr.mxu0 0.0
    %173 = vmatpush1.msra.mxu0 %v162
    %174 = vmatprep.subr.mxu0 0.0
    %175 = vmatpush1.msra.mxu0 %v163
    %176 = vmatprep.subr.mxu0 0.0
    %177 = vmatpush1.msra.mxu0 0.0
    %178 = vmatprep.subr.mxu0 0.0
    %179 = vmatpush1.msra.mxu0 0.0
    %180 = vmatprep.subr.mxu0 0.0
    %181 = vmatpush1.msra.mxu0 0.0
    %182 = vmatprep.subr.mxu0 0.0
    %183 = vmatpush1.msra.mxu0 0.0
    %184 = vmatprep.subr.mxu0 0.0
    %185 = vmatpush1.msra.mxu0 0.0
    %186 = vmatprep.subr.mxu0 0.0
    %187 = vmatpush1.msra.mxu0 0.0
    %188 = vmatprep.subr.mxu0 0.0
    %189 = vmatpush1.msra.mxu0 0.0
    %190 = vmatprep.subr.mxu0 0.0
    %191 = vmatpush1.msra.mxu0 0.0
    %192 = vmatprep.subr.mxu0 0.0
    %193 = vmatpush1.msra.mxu0 0.0
    %194 = vmatprep.subr.mxu0 0.0
    %195 = vmatpush1.msra.mxu0 0.0
    %196 = vmatprep.subr.mxu0 0.0
    %197 = vmatpush1.msra.mxu0 0.0
    %198 = vmatprep.subr.mxu0 0.0
    %199 = vmatpush1.msra.mxu0 0.0
    %200 = vmatprep.subr.mxu0 0.0
    %201 = vmatpush1.msra.mxu0 0.0
    %202 = vmatprep.subr.mxu0 0.0
    %203 = vmatpush1.msra.mxu0 0.0
    %204 = vmatprep.subr.mxu0 0.0
    %205 = vmatpush1.msra.mxu0 0.0
    %206 = vmatprep.subr.mxu0 0.0
    %207 = vmatpush1.msra.mxu0 0.0
    %208 = vmatprep.subr.mxu0 0.0
    %209 = vmatpush1.msra.mxu0 0.0
    %210 = vmatprep.subr.mxu0 0.0
    %211 = vmatpush1.msra.mxu0 0.0
    %212 = vmatprep.subr.mxu0 0.0
    %213 = vmatpush1.msra.mxu0 0.0
    %214 = vmatprep.subr.mxu0 0.0
    %215 = vmatpush1.msra.mxu0 0.0
    %216 = vmatprep.subr.mxu0 0.0
    %217 = vmatpush1.msra.mxu0 0.0
    %218 = vmatprep.subr.mxu0 0.0
    %219 = vmatpush1.msra.mxu0 0.0
    %220 = vmatprep.subr.mxu0 0.0
    %221 = vmatpush1.msra.mxu0 0.0
    %222 = vmatprep.subr.mxu0 0.0
    %223 = vmatpush1.msra.mxu0 0.0
    %224 = vmatprep.subr.mxu0 0.0
    %225 = vmatpush1.msra.mxu0 0.0
    %226 = vmatprep.subr.mxu0 0.0
    %227 = vmatpush1.msra.mxu0 0.0
    %228 = vmatprep.subr.mxu0 0.0
    %229 = vmatpush1.msra.mxu0 0.0
    %230 = vmatprep.subr.mxu0 0.0
    %231 = vmatpush1.msra.mxu0 0.0
    %232 = vmatprep.mubr.f32.mxu0 0.0
    %233 = vmatmul.mubr.f32.gmra.mrb[0].mxu0 %v166
    %v234 = vpop.f32.mrb[0].mxu0
    %v235 = vadd.f32 0.0, %v234
    %v236 = vpop.f32.mrb[0].mxu0
    %237 = vdwg.mxu0
    %v238 = vld [vmem:[#allocation5] sm:$0xff]
    %v239 = vld [vmem:[#allocation5 + $0x8] sm:$0xff]
    %v240 = vld [vmem:[%s6] sm:$0x1]
    %v242 = vlaneseq
    %v243 = vshrl.u32 %v242, 7
    %v244 = vsub.s32 0, %v243
    %v245 = vrot.slane %v240, %v244
    %vm247 = vcmask 130048
    %v249 = vsel %vm247, %v235, 0
    %251 = vmatprep.subr.mxu0 0.0
    %252 = vmatpush1.msra.mxu0 %v238
    %253 = vmatprep.subr.mxu0 0.0
    %254 = vmatpush1.msra.mxu0 %v239
    %255 = vmatprep.subr.mxu0 0.0
    %256 = vmatpush1.msra.mxu0 0.0
    %257 = vmatprep.subr.mxu0 0.0
    %258 = vmatpush1.msra.mxu0 0.0
    %259 = vmatprep.subr.mxu0 0.0
    %260 = vmatpush1.msra.mxu0 0.0
    %261 = vmatprep.subr.mxu0 0.0
    %262 = vmatpush1.msra.mxu0 0.0
    %263 = vmatprep.subr.mxu0 0.0
    %264 = vmatpush1.msra.mxu0 0.0
    %265 = vmatprep.subr.mxu0 0.0
    %266 = vmatpush1.msra.mxu0 0.0
    %267 = vmatprep.subr.mxu0 0.0
    %268 = vmatpush1.msra.mxu0 0.0
    %269 = vmatprep.subr.mxu0 0.0
    %270 = vmatpush1.msra.mxu0 0.0
    %271 = vmatprep.subr.mxu0 0.0
    %272 = vmatpush1.msra.mxu0 0.0
    %273 = vmatprep.subr.mxu0 0.0
    %274 = vmatpush1.msra.mxu0 0.0
    %275 = vmatprep.subr.mxu0 0.0
    %276 = vmatpush1.msra.mxu0 0.0
    %277 = vmatprep.subr.mxu0 0.0
    %278 = vmatpush1.msra.mxu0 0.0
    %279 = vmatprep.subr.mxu0 0.0
    %280 = vmatpush1.msra.mxu0 0.0
    %281 = vmatprep.subr.mxu0 0.0
    %282 = vmatpush1.msra.mxu0 0.0
    %283 = vmatprep.subr.mxu0 0.0
    %284 = vmatpush1.msra.mxu0 0.0
    %285 = vmatprep.subr.mxu0 0.0
    %286 = vmatpush1.msra.mxu0 0.0
    %287 = vmatprep.subr.mxu0 0.0
    %288 = vmatpush1.msra.mxu0 0.0
    %289 = vmatprep.subr.mxu0 0.0
    %290 = vmatpush1.msra.mxu0 0.0
    %291 = vmatprep.subr.mxu0 0.0
    %292 = vmatpush1.msra.mxu0 0.0
    %293 = vmatprep.subr.mxu0 0.0
    %294 = vmatpush1.msra.mxu0 0.0
    %295 = vmatprep.subr.mxu0 0.0
    %296 = vmatpush1.msra.mxu0 0.0
    %297 = vmatprep.subr.mxu0 0.0
    %298 = vmatpush1.msra.mxu0 0.0
    %299 = vmatprep.subr.mxu0 0.0
    %300 = vmatpush1.msra.mxu0 0.0
    %301 = vmatprep.subr.mxu0 0.0
    %302 = vmatpush1.msra.mxu0 0.0
    %303 = vmatprep.subr.mxu0 0.0
    %304 = vmatpush1.msra.mxu0 0.0
    %305 = vmatprep.subr.mxu0 0.0
    %306 = vmatpush1.msra.mxu0 0.0
    %307 = vmatprep.subr.mxu0 0.0
    %308 = vmatpush1.msra.mxu0 0.0
    %309 = vmatprep.subr.mxu0 0.0
    %310 = vmatpush1.msra.mxu0 0.0
    %311 = vmatprep.subr.mxu0 0.0
    %312 = vmatpush1.msra.mxu0 0.0
    %313 = vmatprep.subr.mxu0 0.0
    %314 = vmatpush1.msra.mxu0 0.0
    %315 = vmatprep.mubr.f32.mxu0 0.0
    %316 = vmatmul.mubr.f32.gmra.mrb[0].mxu0 %v249
    %v317 = vpop.f32.mrb[0].mxu0
    %v318 = vadd.f32 %v245, %v317
    %v319 = vpop.f32.mrb[0].mxu0
    %320 = vdwg.mxu0
    %v321 = vld [vmem:[#allocation7] sm:$0xff]
    %v322 = vld [vmem:[#allocation7 + $0x8] sm:$0xff]
    %v323 = vld [vmem:[#allocation7 + $0x10] sm:$0xff]
    %v324 = vld [vmem:[#allocation7 + $0x18] sm:$0xff]
    %v325 = vld [vmem:[%s7] sm:$0x1]
    %v327 = vlaneseq
    %v328 = vshrl.u32 %v327, 7
    %v329 = vsub.s32 0, %v328
    %v330 = vrot.slane %v325, %v329
    %v333 = vsel %vm164, %v142, 0
    %335 = vmatprep.subr.mxu0 0.0
    %336 = vmatpush1.msra.mxu0 %v321
    %337 = vmatprep.subr.mxu0 0.0
    %338 = vmatpush1.msra.mxu0 %v322
    %339 = vmatprep.subr.mxu0 0.0
    %340 = vmatpush1.msra.mxu0 %v323
    %341 = vmatprep.subr.mxu0 0.0
    %342 = vmatpush1.msra.mxu0 %v324
    %343 = vmatprep.subr.mxu0 0.0
    %344 = vmatpush1.msra.mxu0 0.0
    %345 = vmatprep.subr.mxu0 0.0
    %346 = vmatpush1.msra.mxu0 0.0
    %347 = vmatprep.subr.mxu0 0.0
    %348 = vmatpush1.msra.mxu0 0.0
    %349 = vmatprep.subr.mxu0 0.0
    %350 = vmatpush1.msra.mxu0 0.0
    %351 = vmatprep.subr.mxu0 0.0
    %352 = vmatpush1.msra.mxu0 0.0
    %353 = vmatprep.subr.mxu0 0.0
    %354 = vmatpush1.msra.mxu0 0.0
    %355 = vmatprep.subr.mxu0 0.0
    %356 = vmatpush1.msra.mxu0 0.0
    %357 = vmatprep.subr.mxu0 0.0
    %358 = vmatpush1.msra.mxu0 0.0
    %359 = vmatprep.subr.mxu0 0.0
    %360 = vmatpush1.msra.mxu0 0.0
    %361 = vmatprep.subr.mxu0 0.0
    %362 = vmatpush1.msra.mxu0 0.0
    %363 = vmatprep.subr.mxu0 0.0
    %364 = vmatpush1.msra.mxu0 0.0
    %365 = vmatprep.subr.mxu0 0.0
    %366 = vmatpush1.msra.mxu0 0.0
    %367 = vmatprep.subr.mxu0 0.0
    %368 = vmatpush1.msra.mxu0 0.0
    %369 = vmatprep.subr.mxu0 0.0
    %370 = vmatpush1.msra.mxu0 0.0
    %371 = vmatprep.subr.mxu0 0.0
    %372 = vmatpush1.msra.mxu0 0.0
    %373 = vmatprep.subr.mxu0 0.0
    %374 = vmatpush1.msra.mxu0 0.0
    %375 = vmatprep.subr.mxu0 0.0
    %376 = vmatpush1.msra.mxu0 0.0
    %377 = vmatprep.subr.mxu0 0.0
    %378 = vmatpush1.msra.mxu0 0.0
    %379 = vmatprep.subr.mxu0 0.0
    %380 = vmatpush1.msra.mxu0 0.0
    %381 = vmatprep.subr.mxu0 0.0
    %382 = vmatpush1.msra.mxu0 0.0
    %383 = vmatprep.subr.mxu0 0.0
    %384 = vmatpush1.msra.mxu0 0.0
    %385 = vmatprep.subr.mxu0 0.0
    %386 = vmatpush1.msra.mxu0 0.0
    %387 = vmatprep.subr.mxu0 0.0
    %388 = vmatpush1.msra.mxu0 0.0
    %389 = vmatprep.subr.mxu0 0.0
    %390 = vmatpush1.msra.mxu0 0.0
    %391 = vmatprep.subr.mxu0 0.0
    %392 = vmatpush1.msra.mxu0 0.0
    %393 = vmatprep.subr.mxu0 0.0
    %394 = vmatpush1.msra.mxu0 0.0
    %395 = vmatprep.subr.mxu0 0.0
    %396 = vmatpush1.msra.mxu0 0.0
    %397 = vmatprep.subr.mxu0 0.0
    %398 = vmatpush1.msra.mxu0 0.0
    %399 = vmatprep.mubr.f32.mxu0 0.0
    %400 = vmatmul.mubr.f32.gmra.mrb[0].mxu0 %v333
    %v401 = vpop.f32.mrb[0].mxu0
    %v402 = vadd.f32 %v330, %v401
    %v403 = vpop.f32.mrb[0].mxu0
    %404 = vdwg.mxu0
    %v405 = vadd.f32 %v318, %v402
    %v406 = vxor.u32 %v405, 2147483648
    %v407 = vmul.f32 %v406, 1.442695
    %v408 = vpow.pop %v407
    %v409 = vadd.f32 %v408, 1.0
    %v410 = vrcp.pop %v409
    %v411 = vmul.f32 1.0, %v410
    %413 = vrot.lane.b32.xlu0 %v402, 64
    %v414 = vpop.permute.xlu0 %413
    %v416 = vmul.f32 %v411, %v414
    %418 = vrot.lane.b32.xlu0 %v416, 64
    %v419 = vpop.permute.xlu0 %418
    %v421 = vadd.f32 %v318, %v419
    %v422 = vtanh.pop %v421
    %v423 = vsub.f32 1.0, %v411
    %425 = vrot.lane.b32.xlu0 %v422, 96
    %v426 = vpop.permute.xlu0 %425
    %v428 = vmul.f32 %v423, %v426
    %429 = vrot.lane.b32.xlu0 %v142, 32
    %v430 = vpop.permute.xlu0 %429
    %v432 = vmul.f32 %v411, %v430
    %v433 = vadd.f32 %v428, %v432
    %v434 = vld [vmem:[#allocation8] sm:$0xff]
    %v435 = vld [vmem:[#allocation8 + $0x8] sm:$0xff]
    %v436 = vld [vmem:[#allocation8 + $0x10] sm:$0xff]
    %v437 = vld [vmem:[#allocation8 + $0x18] sm:$0xff]
    %439 = vrot.lane.b32.xlu0 %v433, 96
    %v440 = vpop.permute.xlu0 %439
    %v441 = vsel %vm164, %v440, 0
    %443 = vmatprep.subr.mxu0 0.0
    %444 = vmatpush1.msra.mxu0 %v434
    %445 = vmatprep.subr.mxu0 0.0
    %446 = vmatpush1.msra.mxu0 %v435
    %447 = vmatprep.subr.mxu0 0.0
    %448 = vmatpush1.msra.mxu0 %v436
    %449 = vmatprep.subr.mxu0 0.0
    %450 = vmatpush1.msra.mxu0 %v437
    %451 = vmatprep.subr.mxu0 0.0
    %452 = vmatpush1.msra.mxu0 0.0
    %453 = vmatprep.subr.mxu0 0.0
    %454 = vmatpush1.msra.mxu0 0.0
    %455 = vmatprep.subr.mxu0 0.0
    %456 = vmatpush1.msra.mxu0 0.0
    %457 = vmatprep.subr.mxu0 0.0
    %458 = vmatpush1.msra.mxu0 0.0
    %459 = vmatprep.subr.mxu0 0.0
    %460 = vmatpush1.msra.mxu0 0.0
    %461 = vmatprep.subr.mxu0 0.0
    %462 = vmatpush1.msra.mxu0 0.0
    %463 = vmatprep.subr.mxu0 0.0
    %464 = vmatpush1.msra.mxu0 0.0
    %465 = vmatprep.subr.mxu0 0.0
    %466 = vmatpush1.msra.mxu0 0.0
    %467 = vmatprep.subr.mxu0 0.0
    %468 = vmatpush1.msra.mxu0 0.0
    %469 = vmatprep.subr.mxu0 0.0
    %470 = vmatpush1.msra.mxu0 0.0
    %471 = vmatprep.subr.mxu0 0.0
    %472 = vmatpush1.msra.mxu0 0.0
    %473 = vmatprep.subr.mxu0 0.0
    %474 = vmatpush1.msra.mxu0 0.0
    %475 = vmatprep.subr.mxu0 0.0
    %476 = vmatpush1.msra.mxu0 0.0
    %477 = vmatprep.subr.mxu0 0.0
    %478 = vmatpush1.msra.mxu0 0.0
    %479 = vmatprep.subr.mxu0 0.0
    %480 = vmatpush1.msra.mxu0 0.0
    %481 = vmatprep.subr.mxu0 0.0
    %482 = vmatpush1.msra.mxu0 0.0
    %483 = vmatprep.subr.mxu0 0.0
    %484 = vmatpush1.msra.mxu0 0.0
    %485 = vmatprep.subr.mxu0 0.0
    %486 = vmatpush1.msra.mxu0 0.0
    %487 = vmatprep.subr.mxu0 0.0
    %488 = vmatpush1.msra.mxu0 0.0
    %489 = vmatprep.subr.mxu0 0.0
    %490 = vmatpush1.msra.mxu0 0.0
    %491 = vmatprep.subr.mxu0 0.0
    %492 = vmatpush1.msra.mxu0 0.0
    %493 = vmatprep.subr.mxu0 0.0
    %494 = vmatpush1.msra.mxu0 0.0
    %495 = vmatprep.subr.mxu0 0.0
    %496 = vmatpush1.msra.mxu0 0.0
    %497 = vmatprep.subr.mxu0 0.0
    %498 = vmatpush1.msra.mxu0 0.0
    %499 = vmatprep.subr.mxu0 0.0
    %500 = vmatpush1.msra.mxu0 0.0
    %501 = vmatprep.subr.mxu0 0.0
    %502 = vmatpush1.msra.mxu0 0.0
    %503 = vmatprep.subr.mxu0 0.0
    %504 = vmatpush1.msra.mxu0 0.0
    %505 = vmatprep.subr.mxu0 0.0
    %506 = vmatpush1.msra.mxu0 0.0
    %507 = vmatprep.mubr.f32.mxu0 0.0
    %508 = vmatmul.mubr.f32.gmra.mrb[0].mxu0 %v441
    %v509 = vpop.f32.mrb[0].mxu0
    %v510 = vadd.f32 0.0, %v509
    %v511 = vpop.f32.mrb[0].mxu0
    %512 = vdwg.mxu0
    %v513 = vld [vmem:[#allocation10] sm:$0x1]
    %v515 = vlaneseq
    %v516 = vshrl.u32 %v515, 7
    %v517 = vsub.s32 0, %v516
    %v518 = vrot.slane %v513, %v517
    %519 = vrot.lane.b32.xlu0 %v518, 32
    %v520 = vpop.permute.xlu0 %519
    %v522 = vmul.f32 %v433, %v520
    %524 = vrot.lane.b32.xlu0 %v522, 96
    %v525 = vpop.permute.xlu0 %524
    %v527 = vsel %vm164, %v525, 0.0
    %528 = vadd.xlane.f32.xlu0 %v527
    %v529 = vpop.xlane.xlu0 %528
    %v531 = vcombine.high %v510, %v510
    %v533 = vunpack.c.l.s4 1966171168
    %v534 = vunpack.c.0.s8 %v533
    %v535 = vlaneseq
    %v536 = vshrl.u32 %v535, 7
    %v537 = vsub.s32 %v534, %v536
    %v538 = vrot.slane %v510, %v537
    %v540 = vunpack.c.l.s4 1966171168
    %v541 = vunpack.c.0.s8 %v540
    %v542 = vlaneseq
    %v543 = vshrl.u32 %v542, 7
    %v544 = vsub.s32 %v541, %v543
    %v545 = vrot.slane %v531, %v544
    %v546 = vcombine.high %v538, %v538
    %v547 = vcombine.high %v545, %v545
    %v549 = vunpack.c.l.s4 1966171168
    %v550 = vunpack.c.0.s8 %v549
    %v551 = vlaneseq
    %v552 = vshrl.u32 %v551, 7
    %v553 = vsub.s32 %v550, %v552
    %v554 = vrot.slane %v538, %v553
    %v556 = vunpack.c.l.s4 1966171168
    %v557 = vunpack.c.0.s8 %v556
    %v558 = vlaneseq
    %v559 = vshrl.u32 %v558, 7
    %v560 = vsub.s32 %v557, %v559
    %v561 = vrot.slane %v545, %v560
    %v563 = vunpack.c.l.s4 1966171168
    %v564 = vunpack.c.0.s8 %v563
    %v565 = vlaneseq
    %v566 = vshrl.u32 %v565, 7
    %v567 = vsub.s32 %v564, %v566
    %v568 = vrot.slane %v546, %v567
    %v570 = vunpack.c.l.s4 1966171168
    %v571 = vunpack.c.0.s8 %v570
    %v572 = vlaneseq
    %v573 = vshrl.u32 %v572, 7
    %v574 = vsub.s32 %v571, %v573
    %v575 = vrot.slane %v547, %v574
    %v576 = vcombine.high %v554, %v554
    %v577 = vcombine.high %v561, %v561
    %v578 = vcombine.high %v568, %v568
    %v579 = vcombine.high %v575, %v575
    %v580 = vlaneseq
    %v581 = vshrl.u32 %v580, 7
    %v582 = vsub.s32 0, %v581
    %v583 = vrot.slane %v554, %v582
    %v584 = vlaneseq
    %v585 = vshrl.u32 %v584, 7
    %v586 = vsub.s32 0, %v585
    %v587 = vrot.slane %v568, %v586
    %v588 = vlaneseq
    %v589 = vshrl.u32 %v588, 7
    %v590 = vsub.s32 0, %v589
    %v591 = vrot.slane %v576, %v590
    %v592 = vlaneseq
    %v593 = vshrl.u32 %v592, 7
    %v594 = vsub.s32 0, %v593
    %v595 = vrot.slane %v578, %v594
    %v596 = vlaneseq
    %v597 = vshrl.u32 %v596, 7
    %v598 = vsub.s32 0, %v597
    %v599 = vrot.slane %v561, %v598
    %v600 = vlaneseq
    %v601 = vshrl.u32 %v600, 7
    %v602 = vsub.s32 0, %v601
    %v603 = vrot.slane %v575, %v602
    %v604 = vlaneseq
    %v605 = vshrl.u32 %v604, 7
    %v606 = vsub.s32 0, %v605
    %v607 = vrot.slane %v577, %v606
    %v608 = vlaneseq
    %v609 = vshrl.u32 %v608, 7
    %v610 = vsub.s32 0, %v609
    %v611 = vrot.slane %v579, %v610
    %v620 = vmul.f32 %v143, %v583
    %v621 = vmul.f32 %v144, %v587
    %v622 = vmul.f32 %v145, %v591
    %v623 = vmul.f32 %v146, %v595
    %v624 = vmul.f32 %v147, %v599
    %v625 = vmul.f32 %v148, %v603
    %v626 = vmul.f32 %v149, %v607
    %v627 = vmul.f32 %v150, %v611
    %v628 = vsel %vm164, %v620, 0.0
    %629 = vadd.xlane.f32.xlu0 %v628
    %v630 = vpop.xlane.xlu0 %629
    %v631 = vsel %vm164, %v621, 0.0
    %632 = vadd.xlane.f32.xlu0 %v631
    %v633 = vpop.xlane.xlu0 %632
    %v634 = vsel %vm164, %v622, 0.0
    %635 = vadd.xlane.f32.xlu0 %v634
    %v636 = vpop.xlane.xlu0 %635
    %v637 = vsel %vm164, %v623, 0.0
    %638 = vadd.xlane.f32.xlu0 %v637
    %v639 = vpop.xlane.xlu0 %638
    %v640 = vsel %vm164, %v624, 0.0
    %641 = vadd.xlane.f32.xlu0 %v640
    %v642 = vpop.xlane.xlu0 %641
    %v643 = vsel %vm164, %v625, 0.0
    %644 = vadd.xlane.f32.xlu0 %v643
    %v645 = vpop.xlane.xlu0 %644
    %v646 = vsel %vm164, %v626, 0.0
    %647 = vadd.xlane.f32.xlu0 %v646
    %v648 = vpop.xlane.xlu0 %647
    %v649 = vsel %vm164, %v627, 0.0
    %650 = vadd.xlane.f32.xlu0 %v649
    %v651 = vpop.xlane.xlu0 %650
    %v653 = vlaneseq
    %v654 = vshrl.u32 %v653, 7
    %v655 = vsub.s32 0, %v654
    %v656 = vrot.slane %v529, %v655
    %v657 = vlaneseq
    %v658 = vshrl.u32 %v657, 7
    %v659 = vsub.s32 1, %v658
    %v660 = vrot.slane %v529, %v659
    %v661 = vlaneseq
    %v662 = vshrl.u32 %v661, 7
    %v663 = vsub.s32 2, %v662
    %v664 = vrot.slane %v529, %v663
    %v665 = vlaneseq
    %v666 = vshrl.u32 %v665, 7
    %v667 = vsub.s32 3, %v666
    %v668 = vrot.slane %v529, %v667
    %v669 = vlaneseq
    %v670 = vshrl.u32 %v669, 7
    %v671 = vsub.s32 4, %v670
    %v672 = vrot.slane %v529, %v671
    %v673 = vlaneseq
    %v674 = vshrl.u32 %v673, 7
    %v675 = vsub.s32 5, %v674
    %v676 = vrot.slane %v529, %v675
    %v677 = vlaneseq
    %v678 = vshrl.u32 %v677, 7
    %v679 = vsub.s32 6, %v678
    %v680 = vrot.slane %v529, %v679
    %v681 = vlaneseq
    %v682 = vshrl.u32 %v681, 7
    %v683 = vsub.s32 7, %v682
    %v684 = vrot.slane %v529, %v683
    %v693 = vadd.f32 %v630, %v656
    %v694 = vadd.f32 %v633, %v660
    %v695 = vadd.f32 %v636, %v664
    %v696 = vadd.f32 %v639, %v668
    %v697 = vadd.f32 %v642, %v672
    %v698 = vadd.f32 %v645, %v676
    %v699 = vadd.f32 %v648, %v680
    %v700 = vadd.f32 %v651, %v684
    %709 = vset.pattern.permute.xlu0 0
    %710 = vperm.xlu0 %709, %v693
    %v711 = vpop.permute.xlu0 %710
    %712 = vset.pattern.permute.xlu0 0
    %713 = vperm.xlu0 %712, %v694
    %v714 = vpop.permute.xlu0 %713
    %715 = vset.pattern.permute.xlu0 0
    %716 = vperm.xlu0 %715, %v695
    %v717 = vpop.permute.xlu0 %716
    %718 = vset.pattern.permute.xlu0 0
    %719 = vperm.xlu0 %718, %v696
    %v720 = vpop.permute.xlu0 %719
    %721 = vset.pattern.permute.xlu0 0
    %722 = vperm.xlu0 %721, %v697
    %v723 = vpop.permute.xlu0 %722
    %724 = vset.pattern.permute.xlu0 0
    %725 = vperm.xlu0 %724, %v698
    %v726 = vpop.permute.xlu0 %725
    %727 = vset.pattern.permute.xlu0 0
    %728 = vperm.xlu0 %727, %v699
    %v729 = vpop.permute.xlu0 %728
    %730 = vset.pattern.permute.xlu0 0
    %731 = vperm.xlu0 %730, %v700
    %v732 = vpop.permute.xlu0 %731
    %v733 = vlaneseq
    %v734 = vshrl.u32 %v733, 7
    %v735 = vsub.s32 %v153, %v734
    %v736 = vrot.slane %v711, %v735
    %v737 = vlaneseq
    %v738 = vshrl.u32 %v737, 7
    %v739 = vsub.s32 %v153, %v738
    %v740 = vrot.slane %v714, %v739
    %v741 = vlaneseq
    %v742 = vshrl.u32 %v741, 7
    %v743 = vsub.s32 %v153, %v742
    %v744 = vrot.slane %v717, %v743
    %v745 = vlaneseq
    %v746 = vshrl.u32 %v745, 7
    %v747 = vsub.s32 %v153, %v746
    %v748 = vrot.slane %v720, %v747
    %v749 = vlaneseq
    %v750 = vshrl.u32 %v749, 7
    %v751 = vsub.s32 %v153, %v750
    %v752 = vrot.slane %v723, %v751
    %v753 = vlaneseq
    %v754 = vshrl.u32 %v753, 7
    %v755 = vsub.s32 %v153, %v754
    %v756 = vrot.slane %v726, %v755
    %v757 = vlaneseq
    %v758 = vshrl.u32 %v757, 7
    %v759 = vsub.s32 %v153, %v758
    %v760 = vrot.slane %v729, %v759
    %v761 = vlaneseq
    %v762 = vshrl.u32 %v761, 7
    %v763 = vsub.s32 %v153, %v762
    %v764 = vrot.slane %v732, %v763
    %vm765 = vcmask 1041409
    %v766 = vsel %vm765, %v740, %v736
    %vm767 = vcmask 1042434
    %v768 = vsel %vm767, %v744, %v766
    %vm769 = vcmask 1043459
    %v770 = vsel %vm769, %v748, %v768
    %vm771 = vcmask 1044484
    %v772 = vsel %vm771, %v752, %v770
    %vm773 = vcmask 1045509
    %v774 = vsel %vm773, %v756, %v772
    %vm775 = vcmask 1046534
    %v776 = vsel %vm775, %v760, %v774
    %vm777 = vcmask 1047559
    %v778 = vsel %vm777, %v764, %v776
    %vm780 = vcmask 64512
    %v781 = vsel %vm780, %v778, -inf
    %782 = vmax.xlane.f32.xlu0 %v781
    %v783 = vpop.xlane.xlu0 %782
    %v785 = vlaneseq
    %v786 = vshrl.u32 %v785, 7
    %v787 = vsub.s32 0, %v786
    %v788 = vrot.slane %v783, %v787
    %v789 = vlaneseq
    %v790 = vshrl.u32 %v789, 7
    %v791 = vsub.s32 1, %v790
    %v792 = vrot.slane %v783, %v791
    %v793 = vlaneseq
    %v794 = vshrl.u32 %v793, 7
    %v795 = vsub.s32 2, %v794
    %v796 = vrot.slane %v783, %v795
    %v797 = vlaneseq
    %v798 = vshrl.u32 %v797, 7
    %v799 = vsub.s32 3, %v798
    %v800 = vrot.slane %v783, %v799
    %v801 = vlaneseq
    %v802 = vshrl.u32 %v801, 7
    %v803 = vsub.s32 4, %v802
    %v804 = vrot.slane %v783, %v803
    %v805 = vlaneseq
    %v806 = vshrl.u32 %v805, 7
    %v807 = vsub.s32 5, %v806
    %v808 = vrot.slane %v783, %v807
    %v809 = vlaneseq
    %v810 = vshrl.u32 %v809, 7
    %v811 = vsub.s32 6, %v810
    %v812 = vrot.slane %v783, %v811
    %v813 = vlaneseq
    %v814 = vshrl.u32 %v813, 7
    %v815 = vsub.s32 7, %v814
    %v816 = vrot.slane %v783, %v815
    %v825 = vsub.f32 %v693, %v788
    %v826 = vsub.f32 %v694, %v792
    %v827 = vsub.f32 %v695, %v796
    %v828 = vsub.f32 %v696, %v800
    %v829 = vsub.f32 %v697, %v804
    %v830 = vsub.f32 %v698, %v808
    %v831 = vsub.f32 %v699, %v812
    %v832 = vsub.f32 %v700, %v816
    %v833 = vmul.f32 %v825, 1.442695
    %v834 = vpow.pop %v833
    %v835 = vmul.f32 %v826, 1.442695
    %v836 = vpow.pop %v835
    %v837 = vmul.f32 %v827, 1.442695
    %v838 = vpow.pop %v837
    %v839 = vmul.f32 %v828, 1.442695
    %v840 = vpow.pop %v839
    %v841 = vmul.f32 %v829, 1.442695
    %v842 = vpow.pop %v841
    %v843 = vmul.f32 %v830, 1.442695
    %v844 = vpow.pop %v843
    %v845 = vmul.f32 %v831, 1.442695
    %v846 = vpow.pop %v845
    %v847 = vmul.f32 %v832, 1.442695
    %v848 = vpow.pop %v847
    %857 = vset.pattern.permute.xlu0 0
    %858 = vperm.xlu0 %857, %v834
    %v859 = vpop.permute.xlu0 %858
    %860 = vset.pattern.permute.xlu0 0
    %861 = vperm.xlu0 %860, %v836
    %v862 = vpop.permute.xlu0 %861
    %863 = vset.pattern.permute.xlu0 0
    %864 = vperm.xlu0 %863, %v838
    %v865 = vpop.permute.xlu0 %864
    %866 = vset.pattern.permute.xlu0 0
    %867 = vperm.xlu0 %866, %v840
    %v868 = vpop.permute.xlu0 %867
    %869 = vset.pattern.permute.xlu0 0
    %870 = vperm.xlu0 %869, %v842
    %v871 = vpop.permute.xlu0 %870
    %872 = vset.pattern.permute.xlu0 0
    %873 = vperm.xlu0 %872, %v844
    %v874 = vpop.permute.xlu0 %873
    %875 = vset.pattern.permute.xlu0 0
    %876 = vperm.xlu0 %875, %v846
    %v877 = vpop.permute.xlu0 %876
    %878 = vset.pattern.permute.xlu0 0
    %879 = vperm.xlu0 %878, %v848
    %v880 = vpop.permute.xlu0 %879
    %v881 = vlaneseq
    %v882 = vshrl.u32 %v881, 7
    %v883 = vsub.s32 %v153, %v882
    %v884 = vrot.slane %v859, %v883
    %v885 = vlaneseq
    %v886 = vshrl.u32 %v885, 7
    %v887 = vsub.s32 %v153, %v886
    %v888 = vrot.slane %v862, %v887
    %v889 = vlaneseq
    %v890 = vshrl.u32 %v889, 7
    %v891 = vsub.s32 %v153, %v890
    %v892 = vrot.slane %v865, %v891
    %v893 = vlaneseq
    %v894 = vshrl.u32 %v893, 7
    %v895 = vsub.s32 %v153, %v894
    %v896 = vrot.slane %v868, %v895
    %v897 = vlaneseq
    %v898 = vshrl.u32 %v897, 7
    %v899 = vsub.s32 %v153, %v898
    %v900 = vrot.slane %v871, %v899
    %v901 = vlaneseq
    %v902 = vshrl.u32 %v901, 7
    %v903 = vsub.s32 %v153, %v902
    %v904 = vrot.slane %v874, %v903
    %v905 = vlaneseq
    %v906 = vshrl.u32 %v905, 7
    %v907 = vsub.s32 %v153, %v906
    %v908 = vrot.slane %v877, %v907
    %v909 = vlaneseq
    %v910 = vshrl.u32 %v909, 7
    %v911 = vsub.s32 %v153, %v910
    %v912 = vrot.slane %v880, %v911
    %v913 = vsel %vm765, %v888, %v884
    %v914 = vsel %vm767, %v892, %v913
    %v915 = vsel %vm769, %v896, %v914
    %v916 = vsel %vm771, %v900, %v915
    %v917 = vsel %vm773, %v904, %v916
    %v918 = vsel %vm775, %v908, %v917
    %v919 = vsel %vm777, %v912, %v918
    %v921 = vsel %vm780, %v919, 0.0
    %922 = vadd.xlane.f32.xlu0 %v921
    %v923 = vpop.xlane.xlu0 %922
    %v924 = vrcp.pop %v923
    %v925 = vmul.f32 %v923, %v924
    %v926 = vsub.f32 2.0, %v925
    %v927 = vmul.f32 %v924, %v926
    %v929 = vlaneseq
    %v930 = vshrl.u32 %v929, 7
    %v931 = vsub.s32 0, %v930
    %v932 = vrot.slane %v927, %v931
    %v933 = vlaneseq
    %v934 = vshrl.u32 %v933, 7
    %v935 = vsub.s32 1, %v934
    %v936 = vrot.slane %v927, %v935
    %v937 = vlaneseq
    %v938 = vshrl.u32 %v937, 7
    %v939 = vsub.s32 2, %v938
    %v940 = vrot.slane %v927, %v939
    %v941 = vlaneseq
    %v942 = vshrl.u32 %v941, 7
    %v943 = vsub.s32 3, %v942
    %v944 = vrot.slane %v927, %v943
    %v945 = vlaneseq
    %v946 = vshrl.u32 %v945, 7
    %v947 = vsub.s32 4, %v946
    %v948 = vrot.slane %v927, %v947
    %v949 = vlaneseq
    %v950 = vshrl.u32 %v949, 7
    %v951 = vsub.s32 5, %v950
    %v952 = vrot.slane %v927, %v951
    %v953 = vlaneseq
    %v954 = vshrl.u32 %v953, 7
    %v955 = vsub.s32 6, %v954
    %v956 = vrot.slane %v927, %v955
    %v957 = vlaneseq
    %v958 = vshrl.u32 %v957, 7
    %v959 = vsub.s32 7, %v958
    %v960 = vrot.slane %v927, %v959
    %v969 = vmul.f32 %v834, %v932
    %v970 = vmul.f32 %v836, %v936
    %v971 = vmul.f32 %v838, %v940
    %v972 = vmul.f32 %v840, %v944
    %v973 = vmul.f32 %v842, %v948
    %v974 = vmul.f32 %v844, %v952
    %v975 = vmul.f32 %v846, %v956
    %v976 = vmul.f32 %v848, %v960
    %978 = vset.pattern.permute.xlu0 0
    %979 = vperm.xlu0 %978, %v969
    %v980 = vpop.permute.xlu0 %979
    %v981 = vlaneseq
    %v982 = vshrl.u32 %v981, 7
    %v983 = vsub.s32 %v153, %v982
    %v984 = vrot.slane %v980, %v983
    %v985 = vsel %vm780, %v984, 0
    %987 = vmatprep.subr.mxu0 0.0
    %988 = vmatpush1.msra.mxu0 %v143
    %989 = vmatprep.subr.mxu0 0.0
    %990 = vmatpush1.msra.mxu0 0.0
    %991 = vmatprep.subr.mxu0 0.0
    %992 = vmatpush1.msra.mxu0 0.0
    %993 = vmatprep.subr.mxu0 0.0
    %994 = vmatpush1.msra.mxu0 0.0
    %995 = vmatprep.subr.mxu0 0.0
    %996 = vmatpush1.msra.mxu0 0.0
    %997 = vmatprep.subr.mxu0 0.0
    %998 = vmatpush1.msra.mxu0 0.0
    %999 = vmatprep.subr.mxu0 0.0
    %1000 = vmatpush1.msra.mxu0 0.0
    %1001 = vmatprep.subr.mxu0 0.0
    %1002 = vmatpush1.msra.mxu0 0.0
    %1003 = vmatprep.subr.mxu0 0.0
    %1004 = vmatpush1.msra.mxu0 0.0
    %1005 = vmatprep.subr.mxu0 0.0
    %1006 = vmatpush1.msra.mxu0 0.0
    %1007 = vmatprep.subr.mxu0 0.0
    %1008 = vmatpush1.msra.mxu0 0.0
    %1009 = vmatprep.subr.mxu0 0.0
    %1010 = vmatpush1.msra.mxu0 0.0
    %1011 = vmatprep.subr.mxu0 0.0
    %1012 = vmatpush1.msra.mxu0 0.0
    %1013 = vmatprep.subr.mxu0 0.0
    %1014 = vmatpush1.msra.mxu0 0.0
    %1015 = vmatprep.subr.mxu0 0.0
    %1016 = vmatpush1.msra.mxu0 0.0
    %1017 = vmatprep.subr.mxu0 0.0
    %1018 = vmatpush1.msra.mxu0 0.0
    %1019 = vmatprep.subr.mxu0 0.0
    %1020 = vmatpush1.msra.mxu0 0.0
    %1021 = vmatprep.subr.mxu0 0.0
    %1022 = vmatpush1.msra.mxu0 0.0
    %1023 = vmatprep.subr.mxu0 0.0
    %1024 = vmatpush1.msra.mxu0 0.0
    %1025 = vmatprep.subr.mxu0 0.0
    %1026 = vmatpush1.msra.mxu0 0.0
    %1027 = vmatprep.subr.mxu0 0.0
    %1028 = vmatpush1.msra.mxu0 0.0
    %1029 = vmatprep.subr.mxu0 0.0
    %1030 = vmatpush1.msra.mxu0 0.0
    %1031 = vmatprep.subr.mxu0 0.0
    %1032 = vmatpush1.msra.mxu0 0.0
    %1033 = vmatprep.subr.mxu0 0.0
    %1034 = vmatpush1.msra.mxu0 0.0
    %1035 = vmatprep.subr.mxu0 0.0
    %1036 = vmatpush1.msra.mxu0 0.0
    %1037 = vmatprep.subr.mxu0 0.0
    %1038 = vmatpush1.msra.mxu0 0.0
    %1039 = vmatprep.subr.mxu0 0.0
    %1040 = vmatpush1.msra.mxu0 0.0
    %1041 = vmatprep.subr.mxu0 0.0
    %1042 = vmatpush1.msra.mxu0 0.0
    %1043 = vmatprep.subr.mxu0 0.0
    %1044 = vmatpush1.msra.mxu0 0.0
    %1045 = vmatprep.subr.mxu0 0.0
    %1046 = vmatpush1.msra.mxu0 0.0
    %1047 = vmatprep.subr.mxu0 0.0
    %1048 = vmatpush1.msra.mxu0 0.0
    %1049 = vmatprep.subr.mxu0 0.0
    %1050 = vmatpush1.msra.mxu0 0.0
    %1051 = vmatprep.mubr.f32.mxu0 0.0
    %1052 = vmatmul.mubr.f32.gmra.mrb[0].mxu0 %v985
    %v1053 = vpop.f32.mrb[0].mxu0
    %v1054 = vadd.f32 0.0, %v1053
    %v1055 = vpop.f32.mrb[0].mxu0
    %1056 = vdwg.mxu0
    %1058 = vset.pattern.permute.xlu0 0
    %1059 = vperm.xlu0 %1058, %v970
    %v1060 = vpop.permute.xlu0 %1059
    %v1061 = vlaneseq
    %v1062 = vshrl.u32 %v1061, 7
    %v1063 = vsub.s32 %v153, %v1062
    %v1064 = vrot.slane %v1060, %v1063
    %v1065 = vsel %vm780, %v1064, 0
    %1067 = vmatprep.subr.mxu0 0.0
    %1068 = vmatpush1.msra.mxu0 %v144
    %1069 = vmatprep.subr.mxu0 0.0
    %1070 = vmatpush1.msra.mxu0 0.0
    %1071 = vmatprep.subr.mxu0 0.0
    %1072 = vmatpush1.msra.mxu0 0.0
    %1073 = vmatprep.subr.mxu0 0.0
    %1074 = vmatpush1.msra.mxu0 0.0
    %1075 = vmatprep.subr.mxu0 0.0
    %1076 = vmatpush1.msra.mxu0 0.0
    %1077 = vmatprep.subr.mxu0 0.0
    %1078 = vmatpush1.msra.mxu0 0.0
    %1079 = vmatprep.subr.mxu0 0.0
    %1080 = vmatpush1.msra.mxu0 0.0
    %1081 = vmatprep.subr.mxu0 0.0
    %1082 = vmatpush1.msra.mxu0 0.0
    %1083 = vmatprep.subr.mxu0 0.0
    %1084 = vmatpush1.msra.mxu0 0.0
    %1085 = vmatprep.subr.mxu0 0.0
    %1086 = vmatpush1.msra.mxu0 0.0
    %1087 = vmatprep.subr.mxu0 0.0
    %1088 = vmatpush1.msra.mxu0 0.0
    %1089 = vmatprep.subr.mxu0 0.0
    %1090 = vmatpush1.msra.mxu0 0.0
    %1091 = vmatprep.subr.mxu0 0.0
    %1092 = vmatpush1.msra.mxu0 0.0
    %1093 = vmatprep.subr.mxu0 0.0
    %1094 = vmatpush1.msra.mxu0 0.0
    %1095 = vmatprep.subr.mxu0 0.0
    %1096 = vmatpush1.msra.mxu0 0.0
    %1097 = vmatprep.subr.mxu0 0.0
    %1098 = vmatpush1.msra.mxu0 0.0
    %1099 = vmatprep.subr.mxu0 0.0
    %1100 = vmatpush1.msra.mxu0 0.0
    %1101 = vmatprep.subr.mxu0 0.0
    %1102 = vmatpush1.msra.mxu0 0.0
    %1103 = vmatprep.subr.mxu0 0.0
    %1104 = vmatpush1.msra.mxu0 0.0
    %1105 = vmatprep.subr.mxu0 0.0
    %1106 = vmatpush1.msra.mxu0 0.0
    %1107 = vmatprep.subr.mxu0 0.0
    %1108 = vmatpush1.msra.mxu0 0.0
    %1109 = vmatprep.subr.mxu0 0.0
    %1110 = vmatpush1.msra.mxu0 0.0
    %1111 = vmatprep.subr.mxu0 0.0
    %1112 = vmatpush1.msra.mxu0 0.0
    %1113 = vmatprep.subr.mxu0 0.0
    %1114 = vmatpush1.msra.mxu0 0.0
    %1115 = vmatprep.subr.mxu0 0.0
    %1116 = vmatpush1.msra.mxu0 0.0
    %1117 = vmatprep.subr.mxu0 0.0
    %1118 = vmatpush1.msra.mxu0 0.0
    %1119 = vmatprep.subr.mxu0 0.0
    %1120 = vmatpush1.msra.mxu0 0.0
    %1121 = vmatprep.subr.mxu0 0.0
    %1122 = vmatpush1.msra.mxu0 0.0
    %1123 = vmatprep.subr.mxu0 0.0
    %1124 = vmatpush1.msra.mxu0 0.0
    %1125 = vmatprep.subr.mxu0 0.0
    %1126 = vmatpush1.msra.mxu0 0.0
    %1127 = vmatprep.subr.mxu0 0.0
    %1128 = vmatpush1.msra.mxu0 0.0
    %1129 = vmatprep.subr.mxu0 0.0
    %1130 = vmatpush1.msra.mxu0 0.0
    %1131 = vmatprep.mubr.f32.mxu0 0.0
    %1132 = vmatmul.mubr.f32.gmra.mrb[0].mxu0 %v1065
    %v1133 = vpop.f32.mrb[0].mxu0
    %v1134 = vadd.f32 0.0, %v1133
    %v1135 = vpop.f32.mrb[0].mxu0
    %1136 = vdwg.mxu0
    %1138 = vset.pattern.permute.xlu0 0
    %1139 = vperm.xlu0 %1138, %v971
    %v1140 = vpop.permute.xlu0 %1139
    %v1141 = vlaneseq
    %v1142 = vshrl.u32 %v1141, 7
    %v1143 = vsub.s32 %v153, %v1142
    %v1144 = vrot.slane %v1140, %v1143
    %v1145 = vsel %vm780, %v1144, 0
    %1147 = vmatprep.subr.mxu0 0.0
    %1148 = vmatpush1.msra.mxu0 %v145
    %1149 = vmatprep.subr.mxu0 0.0
    %1150 = vmatpush1.msra.mxu0 0.0
    %1151 = vmatprep.subr.mxu0 0.0
    %1152 = vmatpush1.msra.mxu0 0.0
    %1153 = vmatprep.subr.mxu0 0.0
    %1154 = vmatpush1.msra.mxu0 0.0
    %1155 = vmatprep.subr.mxu0 0.0
    %1156 = vmatpush1.msra.mxu0 0.0
    %1157 = vmatprep.subr.mxu0 0.0
    %1158 = vmatpush1.msra.mxu0 0.0
    %1159 = vmatprep.subr.mxu0 0.0
    %1160 = vmatpush1.msra.mxu0 0.0
    %1161 = vmatprep.subr.mxu0 0.0
    %1162 = vmatpush1.msra.mxu0 0.0
    %1163 = vmatprep.subr.mxu0 0.0
    %1164 = vmatpush1.msra.mxu0 0.0
    %1165 = vmatprep.subr.mxu0 0.0
    %1166 = vmatpush1.msra.mxu0 0.0
    %1167 = vmatprep.subr.mxu0 0.0
    %1168 = vmatpush1.msra.mxu0 0.0
    %1169 = vmatprep.subr.mxu0 0.0
    %1170 = vmatpush1.msra.mxu0 0.0
    %1171 = vmatprep.subr.mxu0 0.0
    %1172 = vmatpush1.msra.mxu0 0.0
    %1173 = vmatprep.subr.mxu0 0.0
    %1174 = vmatpush1.msra.mxu0 0.0
    %1175 = vmatprep.subr.mxu0 0.0
    %1176 = vmatpush1.msra.mxu0 0.0
    %1177 = vmatprep.subr.mxu0 0.0
    %1178 = vmatpush1.msra.mxu0 0.0
    %1179 = vmatprep.subr.mxu0 0.0
    %1180 = vmatpush1.msra.mxu0 0.0
    %1181 = vmatprep.subr.mxu0 0.0
    %1182 = vmatpush1.msra.mxu0 0.0
    %1183 = vmatprep.subr.mxu0 0.0
    %1184 = vmatpush1.msra.mxu0 0.0
    %1185 = vmatprep.subr.mxu0 0.0
    %1186 = vmatpush1.msra.mxu0 0.0
    %1187 = vmatprep.subr.mxu0 0.0
    %1188 = vmatpush1.msra.mxu0 0.0
    %1189 = vmatprep.subr.mxu0 0.0
    %1190 = vmatpush1.msra.mxu0 0.0
    %1191 = vmatprep.subr.mxu0 0.0
    %1192 = vmatpush1.msra.mxu0 0.0
    %1193 = vmatprep.subr.mxu0 0.0
    %1194 = vmatpush1.msra.mxu0 0.0
    %1195 = vmatprep.subr.mxu0 0.0
    %1196 = vmatpush1.msra.mxu0 0.0
    %1197 = vmatprep.subr.mxu0 0.0
    %1198 = vmatpush1.msra.mxu0 0.0
    %1199 = vmatprep.subr.mxu0 0.0
    %1200 = vmatpush1.msra.mxu0 0.0
    %1201 = vmatprep.subr.mxu0 0.0
    %1202 = vmatpush1.msra.mxu0 0.0
    %1203 = vmatprep.subr.mxu0 0.0
    %1204 = vmatpush1.msra.mxu0 0.0
    %1205 = vmatprep.subr.mxu0 0.0
    %1206 = vmatpush1.msra.mxu0 0.0
    %1207 = vmatprep.subr.mxu0 0.0
    %1208 = vmatpush1.msra.mxu0 0.0
    %1209 = vmatprep.subr.mxu0 0.0
    %1210 = vmatpush1.msra.mxu0 0.0
    %1211 = vmatprep.mubr.f32.mxu0 0.0
    %1212 = vmatmul.mubr.f32.gmra.mrb[0].mxu0 %v1145
    %v1213 = vpop.f32.mrb[0].mxu0
    %v1214 = vadd.f32 0.0, %v1213
    %v1215 = vpop.f32.mrb[0].mxu0
    %1216 = vdwg.mxu0
    %1218 = vset.pattern.permute.xlu0 0
    %1219 = vperm.xlu0 %1218, %v972
    %v1220 = vpop.permute.xlu0 %1219
    %v1221 = vlaneseq
    %v1222 = vshrl.u32 %v1221, 7
    %v1223 = vsub.s32 %v153, %v1222
    %v1224 = vrot.slane %v1220, %v1223
    %v1225 = vsel %vm780, %v1224, 0
    %1227 = vmatprep.subr.mxu0 0.0
    %1228 = vmatpush1.msra.mxu0 %v146
    %1229 = vmatprep.subr.mxu0 0.0
    %1230 = vmatpush1.msra.mxu0 0.0
    %1231 = vmatprep.subr.mxu0 0.0
    %1232 = vmatpush1.msra.mxu0 0.0
    %1233 = vmatprep.subr.mxu0 0.0
    %1234 = vmatpush1.msra.mxu0 0.0
    %1235 = vmatprep.subr.mxu0 0.0
    %1236 = vmatpush1.msra.mxu0 0.0
    %1237 = vmatprep.subr.mxu0 0.0
    %1238 = vmatpush1.msra.mxu0 0.0
    %1239 = vmatprep.subr.mxu0 0.0
    %1240 = vmatpush1.msra.mxu0 0.0
    %1241 = vmatprep.subr.mxu0 0.0
    %1242 = vmatpush1.msra.mxu0 0.0
    %1243 = vmatprep.subr.mxu0 0.0
    %1244 = vmatpush1.msra.mxu0 0.0
    %1245 = vmatprep.subr.mxu0 0.0
    %1246 = vmatpush1.msra.mxu0 0.0
    %1247 = vmatprep.subr.mxu0 0.0
    %1248 = vmatpush1.msra.mxu0 0.0
    %1249 = vmatprep.subr.mxu0 0.0
    %1250 = vmatpush1.msra.mxu0 0.0
    %1251 = vmatprep.subr.mxu0 0.0
    %1252 = vmatpush1.msra.mxu0 0.0
    %1253 = vmatprep.subr.mxu0 0.0
    %1254 = vmatpush1.msra.mxu0 0.0
    %1255 = vmatprep.subr.mxu0 0.0
    %1256 = vmatpush1.msra.mxu0 0.0
    %1257 = vmatprep.subr.mxu0 0.0
    %1258 = vmatpush1.msra.mxu0 0.0
    %1259 = vmatprep.subr.mxu0 0.0
    %1260 = vmatpush1.msra.mxu0 0.0
    %1261 = vmatprep.subr.mxu0 0.0
    %1262 = vmatpush1.msra.mxu0 0.0
    %1263 = vmatprep.subr.mxu0 0.0
    %1264 = vmatpush1.msra.mxu0 0.0
    %1265 = vmatprep.subr.mxu0 0.0
    %1266 = vmatpush1.msra.mxu0 0.0
    %1267 = vmatprep.subr.mxu0 0.0
    %1268 = vmatpush1.msra.mxu0 0.0
    %1269 = vmatprep.subr.mxu0 0.0
    %1270 = vmatpush1.msra.mxu0 0.0
    %1271 = vmatprep.subr.mxu0 0.0
    %1272 = vmatpush1.msra.mxu0 0.0
    %1273 = vmatprep.subr.mxu0 0.0
    %1274 = vmatpush1.msra.mxu0 0.0
    %1275 = vmatprep.subr.mxu0 0.0
    %1276 = vmatpush1.msra.mxu0 0.0
    %1277 = vmatprep.subr.mxu0 0.0
    %1278 = vmatpush1.msra.mxu0 0.0
    %1279 = vmatprep.subr.mxu0 0.0
    %1280 = vmatpush1.msra.mxu0 0.0
    %1281 = vmatprep.subr.mxu0 0.0
    %1282 = vmatpush1.msra.mxu0 0.0
    %1283 = vmatprep.subr.mxu0 0.0
    %1284 = vmatpush1.msra.mxu0 0.0
    %1285 = vmatprep.subr.mxu0 0.0
    %1286 = vmatpush1.msra.mxu0 0.0
    %1287 = vmatprep.subr.mxu0 0.0
    %1288 = vmatpush1.msra.mxu0 0.0
    %1289 = vmatprep.subr.mxu0 0.0
    %1290 = vmatpush1.msra.mxu0 0.0
    %1291 = vmatprep.mubr.f32.mxu0 0.0
    %1292 = vmatmul.mubr.f32.gmra.mrb[0].mxu0 %v1225
    %v1293 = vpop.f32.mrb[0].mxu0
    %v1294 = vadd.f32 0.0, %v1293
    %v1295 = vpop.f32.mrb[0].mxu0
    %1296 = vdwg.mxu0
    %1298 = vset.pattern.permute.xlu0 0
    %1299 = vperm.xlu0 %1298, %v973
    %v1300 = vpop.permute.xlu0 %1299
    %v1301 = vlaneseq
    %v1302 = vshrl.u32 %v1301, 7
    %v1303 = vsub.s32 %v153, %v1302
    %v1304 = vrot.slane %v1300, %v1303
    %v1305 = vsel %vm780, %v1304, 0
    %1307 = vmatprep.subr.mxu0 0.0
    %1308 = vmatpush1.msra.mxu0 %v147
    %1309 = vmatprep.subr.mxu0 0.0
    %1310 = vmatpush1.msra.mxu0 0.0
    %1311 = vmatprep.subr.mxu0 0.0
    %1312 = vmatpush1.msra.mxu0 0.0
    %1313 = vmatprep.subr.mxu0 0.0
    %1314 = vmatpush1.msra.mxu0 0.0
    %1315 = vmatprep.subr.mxu0 0.0
    %1316 = vmatpush1.msra.mxu0 0.0
    %1317 = vmatprep.subr.mxu0 0.0
    %1318 = vmatpush1.msra.mxu0 0.0
    %1319 = vmatprep.subr.mxu0 0.0
    %1320 = vmatpush1.msra.mxu0 0.0
    %1321 = vmatprep.subr.mxu0 0.0
    %1322 = vmatpush1.msra.mxu0 0.0
    %1323 = vmatprep.subr.mxu0 0.0
    %1324 = vmatpush1.msra.mxu0 0.0
    %1325 = vmatprep.subr.mxu0 0.0
    %1326 = vmatpush1.msra.mxu0 0.0
    %1327 = vmatprep.subr.mxu0 0.0
    %1328 = vmatpush1.msra.mxu0 0.0
    %1329 = vmatprep.subr.mxu0 0.0
    %1330 = vmatpush1.msra.mxu0 0.0
    %1331 = vmatprep.subr.mxu0 0.0
    %1332 = vmatpush1.msra.mxu0 0.0
    %1333 = vmatprep.subr.mxu0 0.0
    %1334 = vmatpush1.msra.mxu0 0.0
    %1335 = vmatprep.subr.mxu0 0.0
    %1336 = vmatpush1.msra.mxu0 0.0
    %1337 = vmatprep.subr.mxu0 0.0
    %1338 = vmatpush1.msra.mxu0 0.0
    %1339 = vmatprep.subr.mxu0 0.0
    %1340 = vmatpush1.msra.mxu0 0.0
    %1341 = vmatprep.subr.mxu0 0.0
    %1342 = vmatpush1.msra.mxu0 0.0
    %1343 = vmatprep.subr.mxu0 0.0
    %1344 = vmatpush1.msra.mxu0 0.0
    %1345 = vmatprep.subr.mxu0 0.0
    %1346 = vmatpush1.msra.mxu0 0.0
    %1347 = vmatprep.subr.mxu0 0.0
    %1348 = vmatpush1.msra.mxu0 0.0
    %1349 = vmatprep.subr.mxu0 0.0
    %1350 = vmatpush1.msra.mxu0 0.0
    %1351 = vmatprep.subr.mxu0 0.0
    %1352 = vmatpush1.msra.mxu0 0.0
    %1353 = vmatprep.subr.mxu0 0.0
    %1354 = vmatpush1.msra.mxu0 0.0
    %1355 = vmatprep.subr.mxu0 0.0
    %1356 = vmatpush1.msra.mxu0 0.0
    %1357 = vmatprep.subr.mxu0 0.0
    %1358 = vmatpush1.msra.mxu0 0.0
    %1359 = vmatprep.subr.mxu0 0.0
    %1360 = vmatpush1.msra.mxu0 0.0
    %1361 = vmatprep.subr.mxu0 0.0
    %1362 = vmatpush1.msra.mxu0 0.0
    %1363 = vmatprep.subr.mxu0 0.0
    %1364 = vmatpush1.msra.mxu0 0.0
    %1365 = vmatprep.subr.mxu0 0.0
    %1366 = vmatpush1.msra.mxu0 0.0
    %1367 = vmatprep.subr.mxu0 0.0
    %1368 = vmatpush1.msra.mxu0 0.0
    %1369 = vmatprep.subr.mxu0 0.0
    %1370 = vmatpush1.msra.mxu0 0.0
    %1371 = vmatprep.mubr.f32.mxu0 0.0
    %1372 = vmatmul.mubr.f32.gmra.mrb[0].mxu0 %v1305
    %v1373 = vpop.f32.mrb[0].mxu0
    %v1374 = vadd.f32 0.0, %v1373
    %v1375 = vpop.f32.mrb[0].mxu0
    %1376 = vdwg.mxu0
    %1378 = vset.pattern.permute.xlu0 0
    %1379 = vperm.xlu0 %1378, %v974
    %v1380 = vpop.permute.xlu0 %1379
    %v1381 = vlaneseq
    %v1382 = vshrl.u32 %v1381, 7
    %v1383 = vsub.s32 %v153, %v1382
    %v1384 = vrot.slane %v1380, %v1383
    %v1385 = vsel %vm780, %v1384, 0
    %1387 = vmatprep.subr.mxu0 0.0
    %1388 = vmatpush1.msra.mxu0 %v148
    %1389 = vmatprep.subr.mxu0 0.0
    %1390 = vmatpush1.msra.mxu0 0.0
    %1391 = vmatprep.subr.mxu0 0.0
    %1392 = vmatpush1.msra.mxu0 0.0
    %1393 = vmatprep.subr.mxu0 0.0
    %1394 = vmatpush1.msra.mxu0 0.0
    %1395 = vmatprep.subr.mxu0 0.0
    %1396 = vmatpush1.msra.mxu0 0.0
    %1397 = vmatprep.subr.mxu0 0.0
    %1398 = vmatpush1.msra.mxu0 0.0
    %1399 = vmatprep.subr.mxu0 0.0
    %1400 = vmatpush1.msra.mxu0 0.0
    %1401 = vmatprep.subr.mxu0 0.0
    %1402 = vmatpush1.msra.mxu0 0.0
    %1403 = vmatprep.subr.mxu0 0.0
    %1404 = vmatpush1.msra.mxu0 0.0
    %1405 = vmatprep.subr.mxu0 0.0
    %1406 = vmatpush1.msra.mxu0 0.0
    %1407 = vmatprep.subr.mxu0 0.0
    %1408 = vmatpush1.msra.mxu0 0.0
    %1409 = vmatprep.subr.mxu0 0.0
    %1410 = vmatpush1.msra.mxu0 0.0
    %1411 = vmatprep.subr.mxu0 0.0
    %1412 = vmatpush1.msra.mxu0 0.0
    %1413 = vmatprep.subr.mxu0 0.0
    %1414 = vmatpush1.msra.mxu0 0.0
    %1415 = vmatprep.subr.mxu0 0.0
    %1416 = vmatpush1.msra.mxu0 0.0
    %1417 = vmatprep.subr.mxu0 0.0
    %1418 = vmatpush1.msra.mxu0 0.0
    %1419 = vmatprep.subr.mxu0 0.0
    %1420 = vmatpush1.msra.mxu0 0.0
    %1421 = vmatprep.subr.mxu0 0.0
    %1422 = vmatpush1.msra.mxu0 0.0
    %1423 = vmatprep.subr.mxu0 0.0
    %1424 = vmatpush1.msra.mxu0 0.0
    %1425 = vmatprep.subr.mxu0 0.0
    %1426 = vmatpush1.msra.mxu0 0.0
    %1427 = vmatprep.subr.mxu0 0.0
    %1428 = vmatpush1.msra.mxu0 0.0
    %1429 = vmatprep.subr.mxu0 0.0
    %1430 = vmatpush1.msra.mxu0 0.0
    %1431 = vmatprep.subr.mxu0 0.0
    %1432 = vmatpush1.msra.mxu0 0.0
    %1433 = vmatprep.subr.mxu0 0.0
    %1434 = vmatpush1.msra.mxu0 0.0
    %1435 = vmatprep.subr.mxu0 0.0
    %1436 = vmatpush1.msra.mxu0 0.0
    %1437 = vmatprep.subr.mxu0 0.0
    %1438 = vmatpush1.msra.mxu0 0.0
    %1439 = vmatprep.subr.mxu0 0.0
    %1440 = vmatpush1.msra.mxu0 0.0
    %1441 = vmatprep.subr.mxu0 0.0
    %1442 = vmatpush1.msra.mxu0 0.0
    %1443 = vmatprep.subr.mxu0 0.0
    %1444 = vmatpush1.msra.mxu0 0.0
    %1445 = vmatprep.subr.mxu0 0.0
    %1446 = vmatpush1.msra.mxu0 0.0
    %1447 = vmatprep.subr.mxu0 0.0
    %1448 = vmatpush1.msra.mxu0 0.0
    %1449 = vmatprep.subr.mxu0 0.0
    %1450 = vmatpush1.msra.mxu0 0.0
    %1451 = vmatprep.mubr.f32.mxu0 0.0
    %1452 = vmatmul.mubr.f32.gmra.mrb[0].mxu0 %v1385
    %v1453 = vpop.f32.mrb[0].mxu0
    %v1454 = vadd.f32 0.0, %v1453
    %v1455 = vpop.f32.mrb[0].mxu0
    %1456 = vdwg.mxu0
    %1458 = vset.pattern.permute.xlu0 0
    %1459 = vperm.xlu0 %1458, %v975
    %v1460 = vpop.permute.xlu0 %1459
    %v1461 = vlaneseq
    %v1462 = vshrl.u32 %v1461, 7
    %v1463 = vsub.s32 %v153, %v1462
    %v1464 = vrot.slane %v1460, %v1463
    %v1465 = vsel %vm780, %v1464, 0
    %1467 = vmatprep.subr.mxu0 0.0
    %1468 = vmatpush1.msra.mxu0 %v149
    %1469 = vmatprep.subr.mxu0 0.0
    %1470 = vmatpush1.msra.mxu0 0.0
    %1471 = vmatprep.subr.mxu0 0.0
    %1472 = vmatpush1.msra.mxu0 0.0
    %1473 = vmatprep.subr.mxu0 0.0
    %1474 = vmatpush1.msra.mxu0 0.0
    %1475 = vmatprep.subr.mxu0 0.0
    %1476 = vmatpush1.msra.mxu0 0.0
    %1477 = vmatprep.subr.mxu0 0.0
    %1478 = vmatpush1.msra.mxu0 0.0
    %1479 = vmatprep.subr.mxu0 0.0
    %1480 = vmatpush1.msra.mxu0 0.0
    %1481 = vmatprep.subr.mxu0 0.0
    %1482 = vmatpush1.msra.mxu0 0.0
    %1483 = vmatprep.subr.mxu0 0.0
    %1484 = vmatpush1.msra.mxu0 0.0
    %1485 = vmatprep.subr.mxu0 0.0
    %1486 = vmatpush1.msra.mxu0 0.0
    %1487 = vmatprep.subr.mxu0 0.0
    %1488 = vmatpush1.msra.mxu0 0.0
    %1489 = vmatprep.subr.mxu0 0.0
    %1490 = vmatpush1.msra.mxu0 0.0
    %1491 = vmatprep.subr.mxu0 0.0
    %1492 = vmatpush1.msra.mxu0 0.0
    %1493 = vmatprep.subr.mxu0 0.0
    %1494 = vmatpush1.msra.mxu0 0.0
    %1495 = vmatprep.subr.mxu0 0.0
    %1496 = vmatpush1.msra.mxu0 0.0
    %1497 = vmatprep.subr.mxu0 0.0
    %1498 = vmatpush1.msra.mxu0 0.0
    %1499 = vmatprep.subr.mxu0 0.0
    %1500 = vmatpush1.msra.mxu0 0.0
    %1501 = vmatprep.subr.mxu0 0.0
    %1502 = vmatpush1.msra.mxu0 0.0
    %1503 = vmatprep.subr.mxu0 0.0
    %1504 = vmatpush1.msra.mxu0 0.0
    %1505 = vmatprep.subr.mxu0 0.0
    %1506 = vmatpush1.msra.mxu0 0.0
    %1507 = vmatprep.subr.mxu0 0.0
    %1508 = vmatpush1.msra.mxu0 0.0
    %1509 = vmatprep.subr.mxu0 0.0
    %1510 = vmatpush1.msra.mxu0 0.0
    %1511 = vmatprep.subr.mxu0 0.0
    %1512 = vmatpush1.msra.mxu0 0.0
    %1513 = vmatprep.subr.mxu0 0.0
    %1514 = vmatpush1.msra.mxu0 0.0
    %1515 = vmatprep.subr.mxu0 0.0
    %1516 = vmatpush1.msra.mxu0 0.0
    %1517 = vmatprep.subr.mxu0 0.0
    %1518 = vmatpush1.msra.mxu0 0.0
    %1519 = vmatprep.subr.mxu0 0.0
    %1520 = vmatpush1.msra.mxu0 0.0
    %1521 = vmatprep.subr.mxu0 0.0
    %1522 = vmatpush1.msra.mxu0 0.0
    %1523 = vmatprep.subr.mxu0 0.0
    %1524 = vmatpush1.msra.mxu0 0.0
    %1525 = vmatprep.subr.mxu0 0.0
    %1526 = vmatpush1.msra.mxu0 0.0
    %1527 = vmatprep.subr.mxu0 0.0
    %1528 = vmatpush1.msra.mxu0 0.0
    %1529 = vmatprep.subr.mxu0 0.0
    %1530 = vmatpush1.msra.mxu0 0.0
    %1531 = vmatprep.mubr.f32.mxu0 0.0
    %1532 = vmatmul.mubr.f32.gmra.mrb[0].mxu0 %v1465
    %v1533 = vpop.f32.mrb[0].mxu0
    %v1534 = vadd.f32 0.0, %v1533
    %v1535 = vpop.f32.mrb[0].mxu0
    %1536 = vdwg.mxu0
    %1538 = vset.pattern.permute.xlu0 0
    %1539 = vperm.xlu0 %1538, %v976
    %v1540 = vpop.permute.xlu0 %1539
    %v1541 = vlaneseq
    %v1542 = vshrl.u32 %v1541, 7
    %v1543 = vsub.s32 %v153, %v1542
    %v1544 = vrot.slane %v1540, %v1543
    %v1545 = vsel %vm780, %v1544, 0
    %1547 = vmatprep.subr.mxu0 0.0
    %1548 = vmatpush1.msra.mxu0 %v150
    %1549 = vmatprep.subr.mxu0 0.0
    %1550 = vmatpush1.msra.mxu0 0.0
    %1551 = vmatprep.subr.mxu0 0.0
    %1552 = vmatpush1.msra.mxu0 0.0
    %1553 = vmatprep.subr.mxu0 0.0
    %1554 = vmatpush1.msra.mxu0 0.0
    %1555 = vmatprep.subr.mxu0 0.0
    %1556 = vmatpush1.msra.mxu0 0.0
    %1557 = vmatprep.subr.mxu0 0.0
    %1558 = vmatpush1.msra.mxu0 0.0
    %1559 = vmatprep.subr.mxu0 0.0
    %1560 = vmatpush1.msra.mxu0 0.0
    %1561 = vmatprep.subr.mxu0 0.0
    %1562 = vmatpush1.msra.mxu0 0.0
    %1563 = vmatprep.subr.mxu0 0.0
    %1564 = vmatpush1.msra.mxu0 0.0
    %1565 = vmatprep.subr.mxu0 0.0
    %1566 = vmatpush1.msra.mxu0 0.0
    %1567 = vmatprep.subr.mxu0 0.0
    %1568 = vmatpush1.msra.mxu0 0.0
    %1569 = vmatprep.subr.mxu0 0.0
    %1570 = vmatpush1.msra.mxu0 0.0
    %1571 = vmatprep.subr.mxu0 0.0
    %1572 = vmatpush1.msra.mxu0 0.0
    %1573 = vmatprep.subr.mxu0 0.0
    %1574 = vmatpush1.msra.mxu0 0.0
    %1575 = vmatprep.subr.mxu0 0.0
    %1576 = vmatpush1.msra.mxu0 0.0
    %1577 = vmatprep.subr.mxu0 0.0
    %1578 = vmatpush1.msra.mxu0 0.0
    %1579 = vmatprep.subr.mxu0 0.0
    %1580 = vmatpush1.msra.mxu0 0.0
    %1581 = vmatprep.subr.mxu0 0.0
    %1582 = vmatpush1.msra.mxu0 0.0
    %1583 = vmatprep.subr.mxu0 0.0
    %1584 = vmatpush1.msra.mxu0 0.0
    %1585 = vmatprep.subr.mxu0 0.0
    %1586 = vmatpush1.msra.mxu0 0.0
    %1587 = vmatprep.subr.mxu0 0.0
    %1588 = vmatpush1.msra.mxu0 0.0
    %1589 = vmatprep.subr.mxu0 0.0
    %1590 = vmatpush1.msra.mxu0 0.0
    %1591 = vmatprep.subr.mxu0 0.0
    %1592 = vmatpush1.msra.mxu0 0.0
    %1593 = vmatprep.subr.mxu0 0.0
    %1594 = vmatpush1.msra.mxu0 0.0
    %1595 = vmatprep.subr.mxu0 0.0
    %1596 = vmatpush1.msra.mxu0 0.0
    %1597 = vmatprep.subr.mxu0 0.0
    %1598 = vmatpush1.msra.mxu0 0.0
    %1599 = vmatprep.subr.mxu0 0.0
    %1600 = vmatpush1.msra.mxu0 0.0
    %1601 = vmatprep.subr.mxu0 0.0
    %1602 = vmatpush1.msra.mxu0 0.0
    %1603 = vmatprep.subr.mxu0 0.0
    %1604 = vmatpush1.msra.mxu0 0.0
    %1605 = vmatprep.subr.mxu0 0.0
    %1606 = vmatpush1.msra.mxu0 0.0
    %1607 = vmatprep.subr.mxu0 0.0
    %1608 = vmatpush1.msra.mxu0 0.0
    %1609 = vmatprep.subr.mxu0 0.0
    %1610 = vmatpush1.msra.mxu0 0.0
    %1611 = vmatprep.mubr.f32.mxu0 0.0
    %1612 = vmatmul.mubr.f32.gmra.mrb[0].mxu0 %v1545
    %v1613 = vpop.f32.mrb[0].mxu0
    %v1614 = vadd.f32 0.0, %v1613
    %v1615 = vpop.f32.mrb[0].mxu0
    %1616 = vdwg.mxu0
    %v1617 = vld [vmem:[#allocation11] sm:$0xff]
    %v1618 = vld [vmem:[#allocation11 + $0x8] sm:$0xff]
    %v1619 = vld [vmem:[#allocation11 + $0x10] sm:$0xff]
    %v1620 = vld [vmem:[#allocation11 + $0x18] sm:$0xff]
    %v1621 = vld [vmem:[%s11] sm:$0xff]
    %v1622 = vld [vmem:[%s11 + $0x8] sm:$0xff]
    %v1623 = vld [vmem:[%s11 + $0x10] sm:$0xff]
    %v1624 = vld [vmem:[%s11 + $0x18] sm:$0xff]
    %1625 = vmatprep.subr.mxu0 0.0
    %1626 = vmatpush1.msra.mxu0 %v1621
    %1627 = vmatprep.subr.mxu0 0.0
    %1628 = vmatpush1.msra.mxu0 %v1622
    %1629 = vmatprep.subr.mxu0 0.0
    %1630 = vmatpush1.msra.mxu0 %v1623
    %1631 = vmatprep.subr.mxu0 0.0
    %1632 = vmatpush1.msra.mxu0 %v1624
    %1633 = vmatprep.subr.mxu0 0.0
    %1634 = vmatpush1.msra.mxu0 0.0
    %1635 = vmatprep.subr.mxu0 0.0
    %1636 = vmatpush1.msra.mxu0 0.0
    %1637 = vmatprep.subr.mxu0 0.0
    %1638 = vmatpush1.msra.mxu0 0.0
    %1639 = vmatprep.subr.mxu0 0.0
    %1640 = vmatpush1.msra.mxu0 0.0
    %1641 = vmatprep.subr.mxu0 0.0
    %1642 = vmatpush1.msra.mxu0 0.0
    %1643 = vmatprep.subr.mxu0 0.0
    %1644 = vmatpush1.msra.mxu0 0.0
    %1645 = vmatprep.subr.mxu0 0.0
    %1646 = vmatpush1.msra.mxu0 0.0
    %1647 = vmatprep.subr.mxu0 0.0
    %1648 = vmatpush1.msra.mxu0 0.0
    %1649 = vmatprep.subr.mxu0 0.0
    %1650 = vmatpush1.msra.mxu0 0.0
    %1651 = vmatprep.subr.mxu0 0.0
    %1652 = vmatpush1.msra.mxu0 0.0
    %1653 = vmatprep.subr.mxu0 0.0
    %1654 = vmatpush1.msra.mxu0 0.0
    %1655 = vmatprep.subr.mxu0 0.0
    %1656 = vmatpush1.msra.mxu0 0.0
    %1657 = vmatprep.subr.mxu0 0.0
    %1658 = vmatpush1.msra.mxu0 0.0
    %1659 = vmatprep.subr.mxu0 0.0
    %1660 = vmatpush1.msra.mxu0 0.0
    %1661 = vmatprep.subr.mxu0 0.0
    %1662 = vmatpush1.msra.mxu0 0.0
    %1663 = vmatprep.subr.mxu0 0.0
    %1664 = vmatpush1.msra.mxu0 0.0
    %1665 = vmatprep.subr.mxu0 0.0
    %1666 = vmatpush1.msra.mxu0 0.0
    %1667 = vmatprep.subr.mxu0 0.0
    %1668 = vmatpush1.msra.mxu0 0.0
    %1669 = vmatprep.subr.mxu0 0.0
    %1670 = vmatpush1.msra.mxu0 0.0
    %1671 = vmatprep.subr.mxu0 0.0
    %1672 = vmatpush1.msra.mxu0 0.0
    %1673 = vmatprep.subr.mxu0 0.0
    %1674 = vmatpush1.msra.mxu0 0.0
    %1675 = vmatprep.subr.mxu0 0.0
    %1676 = vmatpush1.msra.mxu0 0.0
    %1677 = vmatprep.subr.mxu0 0.0
    %1678 = vmatpush1.msra.mxu0 0.0
    %1679 = vmatprep.subr.mxu0 0.0
    %1680 = vmatpush1.msra.mxu0 0.0
    %1681 = vmatprep.subr.mxu0 0.0
    %1682 = vmatpush1.msra.mxu0 0.0
    %1683 = vmatprep.subr.mxu0 0.0
    %1684 = vmatpush1.msra.mxu0 0.0
    %1685 = vmatprep.subr.mxu0 0.0
    %1686 = vmatpush1.msra.mxu0 0.0
    %1687 = vmatprep.subr.mxu0 0.0
    %1688 = vmatpush1.msra.mxu0 0.0
    %1689 = vmatprep.mubr.f32.mxu0 0.0
    %1690 = vmatmul.mubr.f32.gmra.mrb[0].mxu0 %v441
    %v1691 = vpop.f32.mrb[0].mxu0
    %v1692 = vadd.f32 0.0, %v1691
    %v1693 = vpop.f32.mrb[0].mxu0
    %1694 = vdwg.mxu0
    %v1703 = vrot.slane %v1134, 7
    %v1704 = vsel %vm765, %v1703, %v1054
    %v1705 = vrot.slane %v1214, 6
    %v1706 = vsel %vm767, %v1705, %v1704
    %v1707 = vrot.slane %v1294, 5
    %v1708 = vsel %vm769, %v1707, %v1706
    %v1709 = vrot.slane %v1374, 4
    %v1710 = vsel %vm771, %v1709, %v1708
    %v1711 = vrot.slane %v1454, 3
    %v1712 = vsel %vm773, %v1711, %v1710
    %v1713 = vrot.slane %v1534, 2
    %v1714 = vsel %vm775, %v1713, %v1712
    %v1715 = vrot.slane %v1614, 1
    %v1716 = vsel %vm777, %v1715, %v1714
    %v1717 = vsel %vm164, %v1716, 0
    %1719 = vmatprep.subr.mxu0 0.0
    %1720 = vmatpush1.msra.mxu0 %v1617
    %1721 = vmatprep.subr.mxu0 0.0
    %1722 = vmatpush1.msra.mxu0 %v1618
    %1723 = vmatprep.subr.mxu0 0.0
    %1724 = vmatpush1.msra.mxu0 %v1619
    %1725 = vmatprep.subr.mxu0 0.0
    %1726 = vmatpush1.msra.mxu0 %v1620
    %1727 = vmatprep.subr.mxu0 0.0
    %1728 = vmatpush1.msra.mxu0 0.0
    %1729 = vmatprep.subr.mxu0 0.0
    %1730 = vmatpush1.msra.mxu0 0.0
    %1731 = vmatprep.subr.mxu0 0.0
    %1732 = vmatpush1.msra.mxu0 0.0
    %1733 = vmatprep.subr.mxu0 0.0
    %1734 = vmatpush1.msra.mxu0 0.0
    %1735 = vmatprep.subr.mxu0 0.0
    %1736 = vmatpush1.msra.mxu0 0.0
    %1737 = vmatprep.subr.mxu0 0.0
    %1738 = vmatpush1.msra.mxu0 0.0
    %1739 = vmatprep.subr.mxu0 0.0
    %1740 = vmatpush1.msra.mxu0 0.0
    %1741 = vmatprep.subr.mxu0 0.0
    %1742 = vmatpush1.msra.mxu0 0.0
    %1743 = vmatprep.subr.mxu0 0.0
    %1744 = vmatpush1.msra.mxu0 0.0
    %1745 = vmatprep.subr.mxu0 0.0
    %1746 = vmatpush1.msra.mxu0 0.0
    %1747 = vmatprep.subr.mxu0 0.0
    %1748 = vmatpush1.msra.mxu0 0.0
    %1749 = vmatprep.subr.mxu0 0.0
    %1750 = vmatpush1.msra.mxu0 0.0
    %1751 = vmatprep.subr.mxu0 0.0
    %1752 = vmatpush1.msra.mxu0 0.0
    %1753 = vmatprep.subr.mxu0 0.0
    %1754 = vmatpush1.msra.mxu0 0.0
    %1755 = vmatprep.subr.mxu0 0.0
    %1756 = vmatpush1.msra.mxu0 0.0
    %1757 = vmatprep.subr.mxu0 0.0
    %1758 = vmatpush1.msra.mxu0 0.0
    %1759 = vmatprep.subr.mxu0 0.0
    %1760 = vmatpush1.msra.mxu0 0.0
    %1761 = vmatprep.subr.mxu0 0.0
    %1762 = vmatpush1.msra.mxu0 0.0
    %1763 = vmatprep.subr.mxu0 0.0
    %1764 = vmatpush1.msra.mxu0 0.0
    %1765 = vmatprep.subr.mxu0 0.0
    %1766 = vmatpush1.msra.mxu0 0.0
    %1767 = vmatprep.subr.mxu0 0.0
    %1768 = vmatpush1.msra.mxu0 0.0
    %1769 = vmatprep.subr.mxu0 0.0
    %1770 = vmatpush1.msra.mxu0 0.0
    %1771 = vmatprep.subr.mxu0 0.0
    %1772 = vmatpush1.msra.mxu0 0.0
    %1773 = vmatprep.subr.mxu0 0.0
    %1774 = vmatpush1.msra.mxu0 0.0
    %1775 = vmatprep.subr.mxu0 0.0
    %1776 = vmatpush1.msra.mxu0 0.0
    %1777 = vmatprep.subr.mxu0 0.0
    %1778 = vmatpush1.msra.mxu0 0.0
    %1779 = vmatprep.subr.mxu0 0.0
    %1780 = vmatpush1.msra.mxu0 0.0
    %1781 = vmatprep.subr.mxu0 0.0
    %1782 = vmatpush1.msra.mxu0 0.0
    %1783 = vmatprep.mubr.f32.mxu0 0.0
    %1784 = vmatmul.mubr.f32.gmra.mrb[0].mxu0 %v1717
    %v1785 = vpop.f32.mrb[0].mxu0
    %v1786 = vadd.f32 %v1692, %v1785
    %v1787 = vpop.f32.mrb[0].mxu0
    %1788 = vdwg.mxu0
    %v1789 = vld [vmem:[%s12] sm:$0x1]
    %v1791 = vlaneseq
    %v1792 = vshrl.u32 %v1791, 7
    %v1793 = vsub.s32 0, %v1792
    %v1794 = vrot.slane %v1789, %v1793
    %v1796 = vadd.f32 %v1786, %v1794
    %v1797 = vtanh.pop %v1796
    %v1798 = vld [vmem:[#allocation13] sm:$0xff]
    %v1799 = vld [vmem:[#allocation13 + $0x8] sm:$0xff]
    %v1800 = vld [vmem:[#allocation13 + $0x10] sm:$0xff]
    %v1801 = vld [vmem:[#allocation13 + $0x18] sm:$0xff]
    %v1802 = vld [vmem:[%s14] sm:$0x1]
    %v1804 = vlaneseq
    %v1805 = vshrl.u32 %v1804, 7
    %v1806 = vsub.s32 0, %v1805
    %v1807 = vrot.slane %v1802, %v1806
    %v1810 = vsel %vm164, %v1797, 0
    %1812 = vmatprep.subr.mxu0 0.0
    %1813 = vmatpush1.msra.mxu0 %v1798
    %1814 = vmatprep.subr.mxu0 0.0
    %1815 = vmatpush1.msra.mxu0 %v1799
    %1816 = vmatprep.subr.mxu0 0.0
    %1817 = vmatpush1.msra.mxu0 %v1800
    %1818 = vmatprep.subr.mxu0 0.0
    %1819 = vmatpush1.msra.mxu0 %v1801
    %1820 = vmatprep.subr.mxu0 0.0
    %1821 = vmatpush1.msra.mxu0 0.0
    %1822 = vmatprep.subr.mxu0 0.0
    %1823 = vmatpush1.msra.mxu0 0.0
    %1824 = vmatprep.subr.mxu0 0.0
    %1825 = vmatpush1.msra.mxu0 0.0
    %1826 = vmatprep.subr.mxu0 0.0
    %1827 = vmatpush1.msra.mxu0 0.0
    %1828 = vmatprep.subr.mxu0 0.0
    %1829 = vmatpush1.msra.mxu0 0.0
    %1830 = vmatprep.subr.mxu0 0.0
    %1831 = vmatpush1.msra.mxu0 0.0
    %1832 = vmatprep.subr.mxu0 0.0
    %1833 = vmatpush1.msra.mxu0 0.0
    %1834 = vmatprep.subr.mxu0 0.0
    %1835 = vmatpush1.msra.mxu0 0.0
    %1836 = vmatprep.subr.mxu0 0.0
    %1837 = vmatpush1.msra.mxu0 0.0
    %1838 = vmatprep.subr.mxu0 0.0
    %1839 = vmatpush1.msra.mxu0 0.0
    %1840 = vmatprep.subr.mxu0 0.0
    %1841 = vmatpush1.msra.mxu0 0.0
    %1842 = vmatprep.subr.mxu0 0.0
    %1843 = vmatpush1.msra.mxu0 0.0
    %1844 = vmatprep.subr.mxu0 0.0
    %1845 = vmatpush1.msra.mxu0 0.0
    %1846 = vmatprep.subr.mxu0 0.0
    %1847 = vmatpush1.msra.mxu0 0.0
    %1848 = vmatprep.subr.mxu0 0.0
    %1849 = vmatpush1.msra.mxu0 0.0
    %1850 = vmatprep.subr.mxu0 0.0
    %1851 = vmatpush1.msra.mxu0 0.0
    %1852 = vmatprep.subr.mxu0 0.0
    %1853 = vmatpush1.msra.mxu0 0.0
    %1854 = vmatprep.subr.mxu0 0.0
    %1855 = vmatpush1.msra.mxu0 0.0
    %1856 = vmatprep.subr.mxu0 0.0
    %1857 = vmatpush1.msra.mxu0 0.0
    %1858 = vmatprep.subr.mxu0 0.0
    %1859 = vmatpush1.msra.mxu0 0.0
    %1860 = vmatprep.subr.mxu0 0.0
    %1861 = vmatpush1.msra.mxu0 0.0
    %1862 = vmatprep.subr.mxu0 0.0
    %1863 = vmatpush1.msra.mxu0 0.0
    %1864 = vmatprep.subr.mxu0 0.0
    %1865 = vmatpush1.msra.mxu0 0.0
    %1866 = vmatprep.subr.mxu0 0.0
    %1867 = vmatpush1.msra.mxu0 0.0
    %1868 = vmatprep.subr.mxu0 0.0
    %1869 = vmatpush1.msra.mxu0 0.0
    %1870 = vmatprep.subr.mxu0 0.0
    %1871 = vmatpush1.msra.mxu0 0.0
    %1872 = vmatprep.subr.mxu0 0.0
    %1873 = vmatpush1.msra.mxu0 0.0
    %1874 = vmatprep.subr.mxu0 0.0
    %1875 = vmatpush1.msra.mxu0 0.0
    %1876 = vmatprep.mubr.f32.mxu0 0.0
    %1877 = vmatmul.mubr.f32.gmra.mrb[0].mxu0 %v1810
    %v1878 = vpop.f32.mrb[0].mxu0
    %v1879 = vadd.f32 %v1807, %v1878
    %v1880 = vpop.f32.mrb[0].mxu0
    %1881 = vdwg.mxu0
    %v1882 = vsel %vm164, %v1879, -inf
    %1883 = vmax.xlane.f32.xlu0 %v1882
    %v1884 = vpop.xlane.xlu0 %1883
    %v1885 = vsub.f32 %v1879, %v1884
    %v1886 = vmul.f32 %v1885, 1.442695
    %v1887 = vpow.pop %v1886
    %v1888 = vsel %vm164, %v1887, 0.0
    %1889 = vadd.xlane.f32.xlu0 %v1888
    %v1890 = vpop.xlane.xlu0 %1889
    %v1891 = vlog2.pop %v1890
    %v1892 = vmul.f32 %v1891, 0.6931472
    %v1893 = vsub.f32 %v1885, %v1892
    %1894 = vst [vmem:[#allocation14] sm:$0xff] 0.0
    %1895 = vst.msk [vmem:[#allocation14] sm:$0xff] %vm164, %v1893
    %vm1896 = vcmask 523520
    %1897 = vst.msk [vmem:[#allocation14] sm:$0xff] %vm1896, %v433
    %v1898 = vadd.s32 %v153, 4294967232
    %v1899 = vlaneseq
    %v1900 = vshrl.u32 %v1899, 7
    %v1901 = vsub.s32 %v1898, %v1900
    %v1902 = vrot.slane %v980, %v1901
    %v1903 = vlaneseq
    %v1904 = vshrl.u32 %v1903, 7
    %v1905 = vsub.s32 %v1898, %v1904
    %v1906 = vrot.slane %v1060, %v1905
    %v1907 = vlaneseq
    %v1908 = vshrl.u32 %v1907, 7
    %v1909 = vsub.s32 %v1898, %v1908
    %v1910 = vrot.slane %v1140, %v1909
    %v1911 = vlaneseq
    %v1912 = vshrl.u32 %v1911, 7
    %v1913 = vsub.s32 %v1898, %v1912
    %v1914 = vrot.slane %v1220, %v1913
    %v1915 = vlaneseq
    %v1916 = vshrl.u32 %v1915, 7
    %v1917 = vsub.s32 %v1898, %v1916
    %v1918 = vrot.slane %v1300, %v1917
    %v1919 = vlaneseq
    %v1920 = vshrl.u32 %v1919, 7
    %v1921 = vsub.s32 %v1898, %v1920
    %v1922 = vrot.slane %v1380, %v1921
    %v1923 = vlaneseq
    %v1924 = vshrl.u32 %v1923, 7
    %v1925 = vsub.s32 %v1898, %v1924
    %v1926 = vrot.slane %v1460, %v1925
    %v1927 = vlaneseq
    %v1928 = vshrl.u32 %v1927, 7
    %v1929 = vsub.s32 %v1898, %v1928
    %v1930 = vrot.slane %v1540, %v1929
    %v1931 = vsel %vm765, %v1906, %v1902
    %v1932 = vsel %vm767, %v1910, %v1931
    %v1933 = vsel %vm769, %v1914, %v1932
    %v1934 = vsel %vm771, %v1918, %v1933
    %v1935 = vsel %vm773, %v1922, %v1934
    %v1936 = vsel %vm775, %v1926, %v1935
    %v1937 = vsel %vm777, %v1930, %v1936
    %vm1939 = vcmask 589312
    %1940 = vst.msk [vmem:[#allocation14] sm:$0xff] %vm1939, %v1937
    %1941 = vrot.lane.b32.xlu0 %v1797, 72
    %v1942 = vpop.permute.xlu0 %1941
    %vm1944 = vcmask 851520
    %1945 = vst.msk [vmem:[#allocation14] sm:$0xff] %vm1944, %v1942
    // Predicated region
    $region90: #{tpu_custom_call.1} parent=1 // pred_check
      _
    $region91: #{tpu_custom_call.1} parent=1 // pred_check_branch
      %1947 = sbr.rel (0) target = $region93
    $region92: #{tpu_custom_call.1} parent=1 // pred_region
      %s1949 = ssub.s32 128, 128
      %1950 = vsyncadd [#allocation4], %s1949
      %s1952 = sshll.u32 [#allocation14], 4
      %s1953 = int_to_ptr.vmem [resolvable:$true] %s1952
      %1955 = dma.vmem_to_hbm [thread:$0]  %s1953, 128, %s15, [#allocation4]
    $region93: #{tpu_custom_call.1} parent=1 // pred_fallthru
      _
    // Predicated region
    $region94: #{tpu_custom_call.1} parent=1 // pred_check
      _
    $region95: #{tpu_custom_call.1} parent=1 // pred_check_branch
      %1957 = sbr.rel (0) target = $region97
    $region96: #{tpu_custom_call.1} parent=1 // pred_region
      %1958 = dma.done [#allocation4], 128
    $region97: #{tpu_custom_call.1} parent=1 // pred_fallthru
      _
    %1959 = vsyncpa [#allocation3], 1
    %1960 = vsyncpa [#allocation6], 1
    %1961 = vsyncpa [#allocation9], 1
    %1962 = vsyncpa [#allocation12], 1
    %1963 = vsyncpa [#allocation4], 1

</llo_original>
